<compile_context>
chip_gen: v6e
topology: v6e:2x2x1
jax: 0.10.0
libtpu: 0.0.40
codegen_flags: <defaults>
</compile_context>

<pallas_src>
import functools

import jax
import jax.numpy as jnp
from jax.experimental import pallas as pl
from jax.experimental.pallas import tpu as pltpu

BN_EPS = 1e-5
L2_EPS = 1e-12
H1 = 256  # classifier hidden width


def _round_up(x, m):
    return (x + m - 1) // m * m


# ----------------------------------------------------------------------------
# Pallas kernel
# ----------------------------------------------------------------------------
def face_kernel(
    x_ref,       # [bt, C, P0p] bf16  raw images, per-image flattened pixels (zero-padded)
    wstem_ref,   # [9, CS, C]   bf16  conv taps: wstem[dy*3+dx, o, c] = conv_w[o, c, dy, dx]
    bstem_ref,   # [CS, 1]      f32
    pool_ref,    # [1, P0p]     f32   1/n_pix at valid conv-output positions, 0 elsewhere
    wl_ref,      # [CS, E]      bf16  backbone last_linear with last_bn folded in
    bl_ref,      # [1, E]       f32
    w1_ref,      # [E, H1]      bf16  classifier fc1 with BN1d folded in
    b1_ref,      # [1, H1]      f32
    w2_ref,      # [H1, NCp]    bf16  classifier fc2 (classes lane-padded to NCp)
    b2_ref,      # [1, NCp]     f32
    emb_ref,     # out [bt, E]   f32  L2-normalized embeddings
    logits_ref,  # out [bt, NCp] f32  class scores (padded lanes hold bias only)
    pooled_ref,  # scratch [bt, CS] f32
    *, img_w, n_shift,
):
    bt = x_ref.shape[0]
    # All nine shifted views share length L; the dropped tail positions (and everything the
    # pooling vector zeroes) are invalid conv outputs, so no valid pixel is lost.
    L = x_ref.shape[2] - n_shift
    pool_w = pool_ref[...][:, :L]       # [1, L]
    bias = bstem_ref[...]               # [CS, 1]

    # --- frozen stem: 3x3 valid conv as 9 shifted matmuls (bf16 in, f32 acc) + ReLU,
    #     then masked global average pooling (mask and 1/n_pix live inside pool_w).
    for b in range(bt):                 # static unroll over the images of this batch tile
        xb = x_ref[b]                   # [C, P0p] bf16
        feat = None
        for dy in range(3):
            for dx in range(3):
                s = dy * img_w + dx
                xs = xb[:, s:s + L]     # [C, L]  static lane-offset window
                contrib = jnp.dot(wstem_ref[dy * 3 + dx], xs,
                                  preferred_element_type=jnp.float32)   # [CS, L] f32
                feat = contrib if feat is None else feat + contrib
        feat = jnp.maximum(feat + bias, 0.0)                            # [CS, L]
        pooled = jnp.sum(feat * pool_w, axis=1)                         # [CS]
        pooled_ref[b:b + 1, :] = pooled[None, :]

    # --- trainable tail: last_linear (+ folded last_bn) -> L2 normalize
    p = pooled_ref[...].astype(jnp.bfloat16)                            # [bt, CS]
    z = jnp.dot(p, wl_ref[...], preferred_element_type=jnp.float32) + bl_ref[...]
    ssq = jnp.sum(z * z, axis=-1, keepdims=True)
    emb = z * jax.lax.rsqrt(jnp.maximum(ssq, L2_EPS * L2_EPS))          # == z / max(||z||, eps)
    emb_ref[...] = emb

    # --- classifier head: FC(+folded BN) -> ReLU -> Dropout(eval = identity) -> FC
    h = jnp.dot(emb.astype(jnp.bfloat16), w1_ref[...],
                preferred_element_type=jnp.float32) + b1_ref[...]
    h = jnp.maximum(h, 0.0)
    logits_ref[...] = jnp.dot(h.astype(jnp.bfloat16), w2_ref[...],
                              preferred_element_type=jnp.float32) + b2_ref[...]


# ----------------------------------------------------------------------------
# Parameter init (matches the pure-JAX reference below)
# ----------------------------------------------------------------------------
def init_params(key, num_classes=10, embedding_size=512, c_in=3, c_stem=8):
    ks = jax.random.split(key, 8)
    return {
        "conv_w": 0.1 * jax.random.normal(ks[0], (c_stem, c_in, 3, 3), jnp.float32),
        "conv_b": 0.01 * jax.random.normal(ks[1], (c_stem,), jnp.float32),
        # backbone.last_linear: Linear(c_stem -> embedding_size, bias=False)
        "ll_w": 0.1 * jax.random.normal(ks[2], (embedding_size, c_stem), jnp.float32),
        # backbone.last_bn: BatchNorm1d(embedding_size), eval-mode running stats
        "bne_g": jnp.ones((embedding_size,), jnp.float32),
        "bne_b": jnp.zeros((embedding_size,), jnp.float32),
        "bne_m": 0.05 * jax.random.normal(ks[3], (embedding_size,), jnp.float32),
        "bne_v": jnp.ones((embedding_size,), jnp.float32)
                 + 0.05 * jax.random.uniform(ks[4], (embedding_size,)),
        # classifier: Linear(E,256) -> BN(256) -> ReLU -> Dropout -> Linear(256,NC)
        "fc1_w": 0.05 * jax.random.normal(ks[5], (H1, embedding_size), jnp.float32),
        "fc1_b": jnp.zeros((H1,), jnp.float32),
        "bn1_g": jnp.ones((H1,), jnp.float32),
        "bn1_b": jnp.zeros((H1,), jnp.float32),
        "bn1_m": jnp.zeros((H1,), jnp.float32),
        "bn1_v": jnp.ones((H1,), jnp.float32),
        "fc2_w": 0.05 * jax.random.normal(ks[6], (num_classes, H1), jnp.float32),
        "fc2_b": jnp.zeros((num_classes,), jnp.float32),
    }


# ----------------------------------------------------------------------------
# Plain-JAX glue: layout prep, BN folding, pallas_call wrapper
# ----------------------------------------------------------------------------
@jax.jit
def _forward_parts(x, params):
    """Returns (embeddings [B,E], logits [B,NC]). Eval-mode semantics."""
    x = x.astype(jnp.float32)
    B, C, H, W = x.shape
    E = params["ll_w"].shape[0]
    NC = params["fc2_w"].shape[0]
    c_stem = params["conv_w"].shape[0]
    Ho, Wo = H - 2, W - 2
    n_pix = Ho * Wo
    P0 = H * W
    P0p = _round_up(P0, 128)          # lane-dense pixel axis per image
    NCp = _round_up(NC, 128)          # lane-dense logits

    # Batch tiling: blocks of 8 rows when possible (keeps (8,128) tiling on the outputs);
    # with B a multiple of 16 the parallel grid has >= 2 blocks (feeds both v7x TensorCores).
    bt = 8 if B % 8 == 0 else B
    n_b = B // bt

    # Raw image stream (no im2col): [B, C, P0p] bf16, per-image row-major flattened pixels.
    x_r = jnp.pad(x.reshape(B, C, P0), ((0, 0), (0, 0), (0, P0p - P0))).astype(jnp.bfloat16)

    # Pooling vector: 1/n_pix at valid 3x3 valid-conv output positions, 0 on the right/bottom
    # borders and in the pad region (this is also the padded-pixel mask).
    p_idx = jnp.arange(P0p)
    valid = (p_idx < P0) & ((p_idx % W) < Wo) & ((p_idx // W) < Ho)
    pool_w = jnp.where(valid, 1.0 / n_pix, 0.0).astype(jnp.float32)[None, :]

    # Conv taps per (dy, dx): wstem[dy*3+dx, o, c] = conv_w[o, c, dy, dx]
    wstem = jnp.transpose(params["conv_w"], (2, 3, 0, 1)).reshape(9, c_stem, C).astype(jnp.bfloat16)
    bstem = params["conv_b"].astype(jnp.float32)[:, None]                      # [CS, 1]

    # Fold last_bn into last_linear (exact in eval mode).
    s_e = params["bne_g"] / jnp.sqrt(params["bne_v"] + BN_EPS)
    wl = (params["ll_w"].T * s_e[None, :]).astype(jnp.bfloat16)                # [CS, E]
    bl = (params["bne_b"] - params["bne_m"] * s_e)[None, :].astype(jnp.float32)

    # Fold classifier BN1d into fc1.
    s_1 = params["bn1_g"] / jnp.sqrt(params["bn1_v"] + BN_EPS)
    w1 = (params["fc1_w"].T * s_1[None, :]).astype(jnp.bfloat16)               # [E, H1]
    b1 = ((params["fc1_b"] - params["bn1_m"]) * s_1 + params["bn1_b"])[None, :].astype(jnp.float32)

    w2 = jnp.pad(params["fc2_w"].T, ((0, 0), (0, NCp - NC))).astype(jnp.bfloat16)  # [H1, NCp]
    b2 = jnp.pad(params["fc2_b"], (0, NCp - NC))[None, :].astype(jnp.float32)

    kern = functools.partial(face_kernel, img_w=W, n_shift=2 * W + 2)

    in_specs = [
        pl.BlockSpec((bt, C, P0p), lambda i: (i, 0, 0)),       # streamed raw-image batch tile
        pl.BlockSpec((9, c_stem, C), lambda i: (0, 0, 0)),
        pl.BlockSpec((c_stem, 1), lambda i: (0, 0)),
        pl.BlockSpec((1, P0p), lambda i: (0, 0)),
        pl.BlockSpec((c_stem, E), lambda i: (0, 0)),
        pl.BlockSpec((1, E), lambda i: (0, 0)),
        pl.BlockSpec((E, H1), lambda i: (0, 0)),
        pl.BlockSpec((1, H1), lambda i: (0, 0)),
        pl.BlockSpec((H1, NCp), lambda i: (0, 0)),
        pl.BlockSpec((1, NCp), lambda i: (0, 0)),
    ]
    out_specs = (pl.BlockSpec((bt, E), lambda i: (i, 0)),
                 pl.BlockSpec((bt, NCp), lambda i: (i, 0)))

    flops = B * (2 * 9 * c_stem * C * P0p + 3 * c_stem * P0p
                 + 2 * c_stem * E + 2 * E * H1 + 2 * H1 * NCp)
    bytes_accessed = (x_r.size * 2 + B * (E + NCp) * 4
                      + 2 * (wstem.size + wl.size + w1.size + w2.size)
                      + 4 * (pool_w.size + bstem.size + bl.size + b1.size + b2.size))

    emb, logits_full = pl.pallas_call(
        kern,
        out_shape=(jax.ShapeDtypeStruct((B, E), jnp.float32),
                   jax.ShapeDtypeStruct((B, NCp), jnp.float32)),
        grid_spec=pltpu.PrefetchScalarGridSpec(
            num_scalar_prefetch=0,
            grid=(n_b,),
            in_specs=in_specs,
            out_specs=out_specs,
            scratch_shapes=[pltpu.VMEM((bt, c_stem), jnp.float32)],
        ),
        compiler_params=pltpu.CompilerParams(
            dimension_semantics=("parallel",),
            vmem_limit_bytes=32 * 1024 * 1024,
        ),
        cost_estimate=pl.CostEstimate(flops=flops, transcendentals=B,
                                      bytes_accessed=bytes_accessed),
    )(x_r, wstem, bstem, pool_w, wl, bl, w1, b1, w2, b2)

    return emb, logits_full[:, :NC]


def face_recognition_forward(x, params, return_embeddings=False):
    emb, logits = _forward_parts(x, params)
    return emb if return_embeddings else logits


# ----------------------------------------------------------------------------
# Pure-JAX reference (eval-mode semantics) for validation
# ----------------------------------------------------------------------------
def reference_forward(x, params):
    x = x.astype(jnp.float32)
    feat = jax.lax.conv_general_dilated(
        x, params["conv_w"], (1, 1), "VALID",
        dimension_numbers=("NCHW", "OIHW", "NCHW"))
    feat = jnp.maximum(feat + params["conv_b"][None, :, None, None], 0.0)
    pooled = feat.mean(axis=(2, 3))
    z = pooled @ params["ll_w"].T
    s = params["bne_g"] / jnp.sqrt(params["bne_v"] + BN_EPS)
    z = (z - params["bne_m"]) * s + params["bne_b"]
    norm = jnp.sqrt(jnp.sum(z * z, -1, keepdims=True))
    emb = z / jnp.maximum(norm, L2_EPS)
    h = emb @ params["fc1_w"].T + params["fc1_b"]
    s1 = params["bn1_g"] / jnp.sqrt(params["bn1_v"] + BN_EPS)
    h = jnp.maximum((h - params["bn1_m"]) * s1 + params["bn1_b"], 0.0)
    return emb, h @ params["fc2_w"].T + params["fc2_b"]


if __name__ == "__main__":
    key = jax.random.PRNGKey(0)
    k_x, k_p = jax.random.split(key)

    B, C, Himg, Wimg = 2, 3, 16, 16
    num_classes, embedding_size = 10, 512

    x = jax.random.normal(k_x, (B, C, Himg, Wimg), jnp.float32)
    params = init_params(k_p, num_classes=num_classes,
                         embedding_size=embedding_size, c_in=C, c_stem=8)

    logits = face_recognition_forward(x, params, return_embeddings=False)
    emb = face_recognition_forward(x, params, return_embeddings=True)
    jax.block_until_ready((logits, emb))

    assert logits.shape == (B, num_classes)
    assert emb.shape == (B, embedding_size)

    emb_ref, logits_ref = reference_forward(x, params)
    assert jnp.allclose(emb, emb_ref, atol=5e-2, rtol=5e-2), "embedding mismatch"
    assert jnp.allclose(logits, logits_ref, atol=5e-2, rtol=5e-2), "logits mismatch"
    print("KERNEL_OK")
</pallas_src>

<mosaic_0001>
module attributes {stable_mosaic.version = 11 : i64} {
  func.func @face_kernel(%arg0: i32, %arg1: memref<2x3x256xbf16, #tpu.memory_space<vmem>>, %arg2: memref<9x8x3xbf16, #tpu.memory_space<vmem>>, %arg3: memref<8x1xf32, #tpu.memory_space<vmem>>, %arg4: memref<1x256xf32, #tpu.memory_space<vmem>>, %arg5: memref<8x512xbf16, #tpu.memory_space<vmem>>, %arg6: memref<1x512xf32, #tpu.memory_space<vmem>>, %arg7: memref<512x256xbf16, #tpu.memory_space<vmem>>, %arg8: memref<1x256xf32, #tpu.memory_space<vmem>>, %arg9: memref<256x128xbf16, #tpu.memory_space<vmem>>, %arg10: memref<1x128xf32, #tpu.memory_space<vmem>>, %arg11: memref<2x512xf32, #tpu.memory_space<vmem>>, %arg12: memref<2x128xf32, #tpu.memory_space<vmem>>, %arg13: memref<2x8xf32, #tpu.memory_space<vmem>>) attributes {dimension_semantics = [#tpu.dimension_semantics<parallel>], iteration_bounds = array<i64: 1>, scalar_prefetch = 0 : i64, scratch_operands = 1 : i64, tpu.core_type = #tpu.core_type<tc>, window_params = [{transform_indices = @transform_0, window_bounds = array<i64: 2, 3, 256>}, {pipeline_mode = #tpu.pipeline_mode<synchronous>, transform_indices = @transform_1, window_bounds = array<i64: 9, 8, 3>}, {pipeline_mode = #tpu.pipeline_mode<synchronous>, transform_indices = @transform_2, window_bounds = array<i64: 8, 1>}, {pipeline_mode = #tpu.pipeline_mode<synchronous>, transform_indices = @transform_3, window_bounds = array<i64: 1, 256>}, {pipeline_mode = #tpu.pipeline_mode<synchronous>, transform_indices = @transform_4, window_bounds = array<i64: 8, 512>}, {pipeline_mode = #tpu.pipeline_mode<synchronous>, transform_indices = @transform_5, window_bounds = array<i64: 1, 512>}, {pipeline_mode = #tpu.pipeline_mode<synchronous>, transform_indices = @transform_6, window_bounds = array<i64: 512, 256>}, {pipeline_mode = #tpu.pipeline_mode<synchronous>, transform_indices = @transform_7, window_bounds = array<i64: 1, 256>}, {pipeline_mode = #tpu.pipeline_mode<synchronous>, transform_indices = @transform_8, window_bounds = array<i64: 256, 128>}, {pipeline_mode = #tpu.pipeline_mode<synchronous>, transform_indices = @transform_9, window_bounds = array<i64: 1, 128>}, {transform_indices = @transform_10, window_bounds = array<i64: 2, 512>}, {transform_indices = @transform_11, window_bounds = array<i64: 2, 128>}]} {
    %c0 = arith.constant 0 : index
    %c0_0 = arith.constant 0 : index
    %0 = vector.load %arg4[%c0, %c0_0] : memref<1x256xf32, #tpu.memory_space<vmem>>, vector<1x256xf32>
    %1 = vector.extract_strided_slice %0 {offsets = [0, 0], sizes = [1, 222], strides = [1, 1]} : vector<1x256xf32> to vector<1x222xf32>
    %c0_1 = arith.constant 0 : index
    %c0_2 = arith.constant 0 : index
    %2 = vector.load %arg3[%c0_1, %c0_2] : memref<8x1xf32, #tpu.memory_space<vmem>>, vector<8x1xf32>
    %c0_3 = arith.constant 0 : index
    %c0_4 = arith.constant 0 : index
    %c0_5 = arith.constant 0 : index
    %3 = vector.load %arg1[%c0_3, %c0_4, %c0_5] : memref<2x3x256xbf16, #tpu.memory_space<vmem>>, vector<1x3x256xbf16>
    %4 = vector.shape_cast %3 : vector<1x3x256xbf16> to vector<3x256xbf16>
    %5 = vector.extract_strided_slice %4 {offsets = [0, 0], sizes = [3, 222], strides = [1, 1]} : vector<3x256xbf16> to vector<3x222xbf16>
    %c0_6 = arith.constant 0 : index
    %c0_7 = arith.constant 0 : index
    %c0_8 = arith.constant 0 : index
    %6 = vector.load %arg2[%c0_6, %c0_7, %c0_8] : memref<9x8x3xbf16, #tpu.memory_space<vmem>>, vector<1x8x3xbf16>
    %7 = vector.shape_cast %6 : vector<1x8x3xbf16> to vector<8x3xbf16>
    %cst = arith.constant dense<0.000000e+00> : vector<8x222xf32>
    %8 = tpu.matmul %7, %5, %cst {dimension_numbers = #tpu.dot_dimension_numbers<[1], [0], [0], [1], [0, 0, 1, 1], [], []>} : vector<8x3xbf16>, vector<3x222xbf16>, vector<8x222xf32> -> vector<8x222xf32>
    %9 = vector.extract_strided_slice %4 {offsets = [0, 1], sizes = [3, 222], strides = [1, 1]} : vector<3x256xbf16> to vector<3x222xbf16>
    %c1 = arith.constant 1 : index
    %c0_9 = arith.constant 0 : index
    %c0_10 = arith.constant 0 : index
    %10 = vector.load %arg2[%c1, %c0_9, %c0_10] : memref<9x8x3xbf16, #tpu.memory_space<vmem>>, vector<1x8x3xbf16>
    %11 = vector.shape_cast %10 : vector<1x8x3xbf16> to vector<8x3xbf16>
    %cst_11 = arith.constant dense<0.000000e+00> : vector<8x222xf32>
    %12 = tpu.matmul %11, %9, %cst_11 {dimension_numbers = #tpu.dot_dimension_numbers<[1], [0], [0], [1], [0, 0, 1, 1], [], []>} : vector<8x3xbf16>, vector<3x222xbf16>, vector<8x222xf32> -> vector<8x222xf32>
    %13 = arith.addf %8, %12 : vector<8x222xf32>
    %14 = vector.extract_strided_slice %4 {offsets = [0, 2], sizes = [3, 222], strides = [1, 1]} : vector<3x256xbf16> to vector<3x222xbf16>
    %c2 = arith.constant 2 : index
    %c0_12 = arith.constant 0 : index
    %c0_13 = arith.constant 0 : index
    %15 = vector.load %arg2[%c2, %c0_12, %c0_13] : memref<9x8x3xbf16, #tpu.memory_space<vmem>>, vector<1x8x3xbf16>
    %16 = vector.shape_cast %15 : vector<1x8x3xbf16> to vector<8x3xbf16>
    %cst_14 = arith.constant dense<0.000000e+00> : vector<8x222xf32>
    %17 = tpu.matmul %16, %14, %cst_14 {dimension_numbers = #tpu.dot_dimension_numbers<[1], [0], [0], [1], [0, 0, 1, 1], [], []>} : vector<8x3xbf16>, vector<3x222xbf16>, vector<8x222xf32> -> vector<8x222xf32>
    %18 = arith.addf %13, %17 : vector<8x222xf32>
    %19 = vector.extract_strided_slice %4 {offsets = [0, 16], sizes = [3, 222], strides = [1, 1]} : vector<3x256xbf16> to vector<3x222xbf16>
    %c3 = arith.constant 3 : index
    %c0_15 = arith.constant 0 : index
    %c0_16 = arith.constant 0 : index
    %20 = vector.load %arg2[%c3, %c0_15, %c0_16] : memref<9x8x3xbf16, #tpu.memory_space<vmem>>, vector<1x8x3xbf16>
    %21 = vector.shape_cast %20 : vector<1x8x3xbf16> to vector<8x3xbf16>
    %cst_17 = arith.constant dense<0.000000e+00> : vector<8x222xf32>
    %22 = tpu.matmul %21, %19, %cst_17 {dimension_numbers = #tpu.dot_dimension_numbers<[1], [0], [0], [1], [0, 0, 1, 1], [], []>} : vector<8x3xbf16>, vector<3x222xbf16>, vector<8x222xf32> -> vector<8x222xf32>
    %23 = arith.addf %18, %22 : vector<8x222xf32>
    %24 = vector.extract_strided_slice %4 {offsets = [0, 17], sizes = [3, 222], strides = [1, 1]} : vector<3x256xbf16> to vector<3x222xbf16>
    %c4 = arith.constant 4 : index
    %c0_18 = arith.constant 0 : index
    %c0_19 = arith.constant 0 : index
    %25 = vector.load %arg2[%c4, %c0_18, %c0_19] : memref<9x8x3xbf16, #tpu.memory_space<vmem>>, vector<1x8x3xbf16>
    %26 = vector.shape_cast %25 : vector<1x8x3xbf16> to vector<8x3xbf16>
    %cst_20 = arith.constant dense<0.000000e+00> : vector<8x222xf32>
    %27 = tpu.matmul %26, %24, %cst_20 {dimension_numbers = #tpu.dot_dimension_numbers<[1], [0], [0], [1], [0, 0, 1, 1], [], []>} : vector<8x3xbf16>, vector<3x222xbf16>, vector<8x222xf32> -> vector<8x222xf32>
    %28 = arith.addf %23, %27 : vector<8x222xf32>
    %29 = vector.extract_strided_slice %4 {offsets = [0, 18], sizes = [3, 222], strides = [1, 1]} : vector<3x256xbf16> to vector<3x222xbf16>
    %c5 = arith.constant 5 : index
    %c0_21 = arith.constant 0 : index
    %c0_22 = arith.constant 0 : index
    %30 = vector.load %arg2[%c5, %c0_21, %c0_22] : memref<9x8x3xbf16, #tpu.memory_space<vmem>>, vector<1x8x3xbf16>
    %31 = vector.shape_cast %30 : vector<1x8x3xbf16> to vector<8x3xbf16>
    %cst_23 = arith.constant dense<0.000000e+00> : vector<8x222xf32>
    %32 = tpu.matmul %31, %29, %cst_23 {dimension_numbers = #tpu.dot_dimension_numbers<[1], [0], [0], [1], [0, 0, 1, 1], [], []>} : vector<8x3xbf16>, vector<3x222xbf16>, vector<8x222xf32> -> vector<8x222xf32>
    %33 = arith.addf %28, %32 : vector<8x222xf32>
    %34 = vector.extract_strided_slice %4 {offsets = [0, 32], sizes = [3, 222], strides = [1, 1]} : vector<3x256xbf16> to vector<3x222xbf16>
    %c6 = arith.constant 6 : index
    %c0_24 = arith.constant 0 : index
    %c0_25 = arith.constant 0 : index
    %35 = vector.load %arg2[%c6, %c0_24, %c0_25] : memref<9x8x3xbf16, #tpu.memory_space<vmem>>, vector<1x8x3xbf16>
    %36 = vector.shape_cast %35 : vector<1x8x3xbf16> to vector<8x3xbf16>
    %cst_26 = arith.constant dense<0.000000e+00> : vector<8x222xf32>
    %37 = tpu.matmul %36, %34, %cst_26 {dimension_numbers = #tpu.dot_dimension_numbers<[1], [0], [0], [1], [0, 0, 1, 1], [], []>} : vector<8x3xbf16>, vector<3x222xbf16>, vector<8x222xf32> -> vector<8x222xf32>
    %38 = arith.addf %33, %37 : vector<8x222xf32>
    %39 = vector.extract_strided_slice %4 {offsets = [0, 33], sizes = [3, 222], strides = [1, 1]} : vector<3x256xbf16> to vector<3x222xbf16>
    %c7 = arith.constant 7 : index
    %c0_27 = arith.constant 0 : index
    %c0_28 = arith.constant 0 : index
    %40 = vector.load %arg2[%c7, %c0_27, %c0_28] : memref<9x8x3xbf16, #tpu.memory_space<vmem>>, vector<1x8x3xbf16>
    %41 = vector.shape_cast %40 : vector<1x8x3xbf16> to vector<8x3xbf16>
    %cst_29 = arith.constant dense<0.000000e+00> : vector<8x222xf32>
    %42 = tpu.matmul %41, %39, %cst_29 {dimension_numbers = #tpu.dot_dimension_numbers<[1], [0], [0], [1], [0, 0, 1, 1], [], []>} : vector<8x3xbf16>, vector<3x222xbf16>, vector<8x222xf32> -> vector<8x222xf32>
    %43 = arith.addf %38, %42 : vector<8x222xf32>
    %44 = vector.extract_strided_slice %4 {offsets = [0, 34], sizes = [3, 222], strides = [1, 1]} : vector<3x256xbf16> to vector<3x222xbf16>
    %c8 = arith.constant 8 : index
    %c0_30 = arith.constant 0 : index
    %c0_31 = arith.constant 0 : index
    %45 = vector.load %arg2[%c8, %c0_30, %c0_31] : memref<9x8x3xbf16, #tpu.memory_space<vmem>>, vector<1x8x3xbf16>
    %46 = vector.shape_cast %45 : vector<1x8x3xbf16> to vector<8x3xbf16>
    %cst_32 = arith.constant dense<0.000000e+00> : vector<8x222xf32>
    %47 = tpu.matmul %46, %44, %cst_32 {dimension_numbers = #tpu.dot_dimension_numbers<[1], [0], [0], [1], [0, 0, 1, 1], [], []>} : vector<8x3xbf16>, vector<3x222xbf16>, vector<8x222xf32> -> vector<8x222xf32>
    %48 = arith.addf %43, %47 : vector<8x222xf32>
    %49 = vector.broadcast %2 : vector<8x1xf32> to vector<8x222xf32>
    %50 = arith.addf %48, %49 : vector<8x222xf32>
    %cst_33 = arith.constant 0.000000e+00 : f32
    %51 = vector.broadcast %cst_33 : f32 to vector<8x222xf32>
    %52 = arith.maximumf %50, %51 : vector<8x222xf32>
    %53 = vector.broadcast %1 : vector<1x222xf32> to vector<8x222xf32>
    %54 = arith.mulf %52, %53 : vector<8x222xf32>
    %cst_34 = arith.constant dense<0.000000e+00> : vector<8xf32>
    %55 = vector.multi_reduction <add>, %54, %cst_34 [1] : vector<8x222xf32> to vector<8xf32>
    %56 = vector.shape_cast %55 : vector<8xf32> to vector<1x8xf32>
    %c0_35 = arith.constant 0 : index
    %c0_36 = arith.constant 0 : index
    %57 = vector.load %arg13[%c0_35, %c0_36] : memref<2x8xf32, #tpu.memory_space<vmem>>, vector<1x8xf32>
    tpu.vector_store %arg13[%c0_35, %c0_36], %56 {strides = array<i32>} : memref<2x8xf32, #tpu.memory_space<vmem>>, vector<1x8xf32>,
    %c1_37 = arith.constant 1 : index
    %c0_38 = arith.constant 0 : index
    %c0_39 = arith.constant 0 : index
    %58 = vector.load %arg1[%c1_37, %c0_38, %c0_39] : memref<2x3x256xbf16, #tpu.memory_space<vmem>>, vector<1x3x256xbf16>
    %59 = vector.shape_cast %58 : vector<1x3x256xbf16> to vector<3x256xbf16>
    %60 = vector.extract_strided_slice %59 {offsets = [0, 0], sizes = [3, 222], strides = [1, 1]} : vector<3x256xbf16> to vector<3x222xbf16>
    %c0_40 = arith.constant 0 : index
    %c0_41 = arith.constant 0 : index
    %c0_42 = arith.constant 0 : index
    %61 = vector.load %arg2[%c0_40, %c0_41, %c0_42] : memref<9x8x3xbf16, #tpu.memory_space<vmem>>, vector<1x8x3xbf16>
    %62 = vector.shape_cast %61 : vector<1x8x3xbf16> to vector<8x3xbf16>
    %cst_43 = arith.constant dense<0.000000e+00> : vector<8x222xf32>
    %63 = tpu.matmul %62, %60, %cst_43 {dimension_numbers = #tpu.dot_dimension_numbers<[1], [0], [0], [1], [0, 0, 1, 1], [], []>} : vector<8x3xbf16>, vector<3x222xbf16>, vector<8x222xf32> -> vector<8x222xf32>
    %64 = vector.extract_strided_slice %59 {offsets = [0, 1], sizes = [3, 222], strides = [1, 1]} : vector<3x256xbf16> to vector<3x222xbf16>
    %c1_44 = arith.constant 1 : index
    %c0_45 = arith.constant 0 : index
    %c0_46 = arith.constant 0 : index
    %65 = vector.load %arg2[%c1_44, %c0_45, %c0_46] : memref<9x8x3xbf16, #tpu.memory_space<vmem>>, vector<1x8x3xbf16>
    %66 = vector.shape_cast %65 : vector<1x8x3xbf16> to vector<8x3xbf16>
    %cst_47 = arith.constant dense<0.000000e+00> : vector<8x222xf32>
    %67 = tpu.matmul %66, %64, %cst_47 {dimension_numbers = #tpu.dot_dimension_numbers<[1], [0], [0], [1], [0, 0, 1, 1], [], []>} : vector<8x3xbf16>, vector<3x222xbf16>, vector<8x222xf32> -> vector<8x222xf32>
    %68 = arith.addf %63, %67 : vector<8x222xf32>
    %69 = vector.extract_strided_slice %59 {offsets = [0, 2], sizes = [3, 222], strides = [1, 1]} : vector<3x256xbf16> to vector<3x222xbf16>
    %c2_48 = arith.constant 2 : index
    %c0_49 = arith.constant 0 : index
    %c0_50 = arith.constant 0 : index
    %70 = vector.load %arg2[%c2_48, %c0_49, %c0_50] : memref<9x8x3xbf16, #tpu.memory_space<vmem>>, vector<1x8x3xbf16>
    %71 = vector.shape_cast %70 : vector<1x8x3xbf16> to vector<8x3xbf16>
    %cst_51 = arith.constant dense<0.000000e+00> : vector<8x222xf32>
    %72 = tpu.matmul %71, %69, %cst_51 {dimension_numbers = #tpu.dot_dimension_numbers<[1], [0], [0], [1], [0, 0, 1, 1], [], []>} : vector<8x3xbf16>, vector<3x222xbf16>, vector<8x222xf32> -> vector<8x222xf32>
    %73 = arith.addf %68, %72 : vector<8x222xf32>
    %74 = vector.extract_strided_slice %59 {offsets = [0, 16], sizes = [3, 222], strides = [1, 1]} : vector<3x256xbf16> to vector<3x222xbf16>
    %c3_52 = arith.constant 3 : index
    %c0_53 = arith.constant 0 : index
    %c0_54 = arith.constant 0 : index
    %75 = vector.load %arg2[%c3_52, %c0_53, %c0_54] : memref<9x8x3xbf16, #tpu.memory_space<vmem>>, vector<1x8x3xbf16>
    %76 = vector.shape_cast %75 : vector<1x8x3xbf16> to vector<8x3xbf16>
    %cst_55 = arith.constant dense<0.000000e+00> : vector<8x222xf32>
    %77 = tpu.matmul %76, %74, %cst_55 {dimension_numbers = #tpu.dot_dimension_numbers<[1], [0], [0], [1], [0, 0, 1, 1], [], []>} : vector<8x3xbf16>, vector<3x222xbf16>, vector<8x222xf32> -> vector<8x222xf32>
    %78 = arith.addf %73, %77 : vector<8x222xf32>
    %79 = vector.extract_strided_slice %59 {offsets = [0, 17], sizes = [3, 222], strides = [1, 1]} : vector<3x256xbf16> to vector<3x222xbf16>
    %c4_56 = arith.constant 4 : index
    %c0_57 = arith.constant 0 : index
    %c0_58 = arith.constant 0 : index
    %80 = vector.load %arg2[%c4_56, %c0_57, %c0_58] : memref<9x8x3xbf16, #tpu.memory_space<vmem>>, vector<1x8x3xbf16>
    %81 = vector.shape_cast %80 : vector<1x8x3xbf16> to vector<8x3xbf16>
    %cst_59 = arith.constant dense<0.000000e+00> : vector<8x222xf32>
    %82 = tpu.matmul %81, %79, %cst_59 {dimension_numbers = #tpu.dot_dimension_numbers<[1], [0], [0], [1], [0, 0, 1, 1], [], []>} : vector<8x3xbf16>, vector<3x222xbf16>, vector<8x222xf32> -> vector<8x222xf32>
    %83 = arith.addf %78, %82 : vector<8x222xf32>
    %84 = vector.extract_strided_slice %59 {offsets = [0, 18], sizes = [3, 222], strides = [1, 1]} : vector<3x256xbf16> to vector<3x222xbf16>
    %c5_60 = arith.constant 5 : index
    %c0_61 = arith.constant 0 : index
    %c0_62 = arith.constant 0 : index
    %85 = vector.load %arg2[%c5_60, %c0_61, %c0_62] : memref<9x8x3xbf16, #tpu.memory_space<vmem>>, vector<1x8x3xbf16>
    %86 = vector.shape_cast %85 : vector<1x8x3xbf16> to vector<8x3xbf16>
    %cst_63 = arith.constant dense<0.000000e+00> : vector<8x222xf32>
    %87 = tpu.matmul %86, %84, %cst_63 {dimension_numbers = #tpu.dot_dimension_numbers<[1], [0], [0], [1], [0, 0, 1, 1], [], []>} : vector<8x3xbf16>, vector<3x222xbf16>, vector<8x222xf32> -> vector<8x222xf32>
    %88 = arith.addf %83, %87 : vector<8x222xf32>
    %89 = vector.extract_strided_slice %59 {offsets = [0, 32], sizes = [3, 222], strides = [1, 1]} : vector<3x256xbf16> to vector<3x222xbf16>
    %c6_64 = arith.constant 6 : index
    %c0_65 = arith.constant 0 : index
    %c0_66 = arith.constant 0 : index
    %90 = vector.load %arg2[%c6_64, %c0_65, %c0_66] : memref<9x8x3xbf16, #tpu.memory_space<vmem>>, vector<1x8x3xbf16>
    %91 = vector.shape_cast %90 : vector<1x8x3xbf16> to vector<8x3xbf16>
    %cst_67 = arith.constant dense<0.000000e+00> : vector<8x222xf32>
    %92 = tpu.matmul %91, %89, %cst_67 {dimension_numbers = #tpu.dot_dimension_numbers<[1], [0], [0], [1], [0, 0, 1, 1], [], []>} : vector<8x3xbf16>, vector<3x222xbf16>, vector<8x222xf32> -> vector<8x222xf32>
    %93 = arith.addf %88, %92 : vector<8x222xf32>
    %94 = vector.extract_strided_slice %59 {offsets = [0, 33], sizes = [3, 222], strides = [1, 1]} : vector<3x256xbf16> to vector<3x222xbf16>
    %c7_68 = arith.constant 7 : index
    %c0_69 = arith.constant 0 : index
    %c0_70 = arith.constant 0 : index
    %95 = vector.load %arg2[%c7_68, %c0_69, %c0_70] : memref<9x8x3xbf16, #tpu.memory_space<vmem>>, vector<1x8x3xbf16>
    %96 = vector.shape_cast %95 : vector<1x8x3xbf16> to vector<8x3xbf16>
    %cst_71 = arith.constant dense<0.000000e+00> : vector<8x222xf32>
    %97 = tpu.matmul %96, %94, %cst_71 {dimension_numbers = #tpu.dot_dimension_numbers<[1], [0], [0], [1], [0, 0, 1, 1], [], []>} : vector<8x3xbf16>, vector<3x222xbf16>, vector<8x222xf32> -> vector<8x222xf32>
    %98 = arith.addf %93, %97 : vector<8x222xf32>
    %99 = vector.extract_strided_slice %59 {offsets = [0, 34], sizes = [3, 222], strides = [1, 1]} : vector<3x256xbf16> to vector<3x222xbf16>
    %c8_72 = arith.constant 8 : index
    %c0_73 = arith.constant 0 : index
    %c0_74 = arith.constant 0 : index
    %100 = vector.load %arg2[%c8_72, %c0_73, %c0_74] : memref<9x8x3xbf16, #tpu.memory_space<vmem>>, vector<1x8x3xbf16>
    %101 = vector.shape_cast %100 : vector<1x8x3xbf16> to vector<8x3xbf16>
    %cst_75 = arith.constant dense<0.000000e+00> : vector<8x222xf32>
    %102 = tpu.matmul %101, %99, %cst_75 {dimension_numbers = #tpu.dot_dimension_numbers<[1], [0], [0], [1], [0, 0, 1, 1], [], []>} : vector<8x3xbf16>, vector<3x222xbf16>, vector<8x222xf32> -> vector<8x222xf32>
    %103 = arith.addf %98, %102 : vector<8x222xf32>
    %104 = vector.broadcast %2 : vector<8x1xf32> to vector<8x222xf32>
    %105 = arith.addf %103, %104 : vector<8x222xf32>
    %cst_76 = arith.constant 0.000000e+00 : f32
    %106 = vector.broadcast %cst_76 : f32 to vector<8x222xf32>
    %107 = arith.maximumf %105, %106 : vector<8x222xf32>
    %108 = vector.broadcast %1 : vector<1x222xf32> to vector<8x222xf32>
    %109 = arith.mulf %107, %108 : vector<8x222xf32>
    %cst_77 = arith.constant dense<0.000000e+00> : vector<8xf32>
    %110 = vector.multi_reduction <add>, %109, %cst_77 [1] : vector<8x222xf32> to vector<8xf32>
    %111 = vector.shape_cast %110 : vector<8xf32> to vector<1x8xf32>
    %c1_78 = arith.constant 1 : index
    %c0_79 = arith.constant 0 : index
    %112 = vector.load %arg13[%c1_78, %c0_79] : memref<2x8xf32, #tpu.memory_space<vmem>>, vector<1x8xf32>
    tpu.vector_store %arg13[%c1_78, %c0_79], %111 {strides = array<i32>} : memref<2x8xf32, #tpu.memory_space<vmem>>, vector<1x8xf32>,
    %c0_80 = arith.constant 0 : index
    %c0_81 = arith.constant 0 : index
    %113 = vector.load %arg13[%c0_80, %c0_81] : memref<2x8xf32, #tpu.memory_space<vmem>>, vector<2x8xf32>
    %114 = arith.truncf %113 : vector<2x8xf32> to vector<2x8xbf16>
    %c0_82 = arith.constant 0 : index
    %c0_83 = arith.constant 0 : index
    %115 = vector.load %arg5[%c0_82, %c0_83] : memref<8x512xbf16, #tpu.memory_space<vmem>>, vector<8x512xbf16>
    %cst_84 = arith.constant dense<0.000000e+00> : vector<2x512xf32>
    %116 = tpu.matmul %114, %115, %cst_84 {dimension_numbers = #tpu.dot_dimension_numbers<[1], [0], [0], [1], [0, 0, 1, 1], [], []>} : vector<2x8xbf16>, vector<8x512xbf16>, vector<2x512xf32> -> vector<2x512xf32>
    %c0_85 = arith.constant 0 : index
    %c0_86 = arith.constant 0 : index
    %117 = vector.load %arg6[%c0_85, %c0_86] : memref<1x512xf32, #tpu.memory_space<vmem>>, vector<1x512xf32>
    %118 = vector.broadcast %117 : vector<1x512xf32> to vector<2x512xf32>
    %119 = arith.addf %116, %118 : vector<2x512xf32>
    %120 = arith.mulf %119, %119 : vector<2x512xf32>
    %cst_87 = arith.constant dense<0.000000e+00> : vector<2xf32>
    %121 = vector.multi_reduction <add>, %120, %cst_87 [1] : vector<2x512xf32> to vector<2xf32>
    %122 = vector.shape_cast %121 : vector<2xf32> to vector<2x1xf32>
    %cst_88 = arith.constant 1.000000e-24 : f32
    %123 = vector.broadcast %cst_88 : f32 to vector<2x1xf32>
    %124 = arith.maximumf %122, %123 : vector<2x1xf32>
    %125 = math.rsqrt %124 : vector<2x1xf32>
    %126 = vector.broadcast %125 : vector<2x1xf32> to vector<2x512xf32>
    %127 = arith.mulf %119, %126 : vector<2x512xf32>
    %c0_89 = arith.constant 0 : index
    %c0_90 = arith.constant 0 : index
    %128 = vector.load %arg11[%c0_89, %c0_90] : memref<2x512xf32, #tpu.memory_space<vmem>>, vector<2x512xf32>
    tpu.vector_store %arg11[%c0_89, %c0_90], %127 {strides = array<i32>} : memref<2x512xf32, #tpu.memory_space<vmem>>, vector<2x512xf32>,
    %129 = arith.truncf %127 : vector<2x512xf32> to vector<2x512xbf16>
    %c0_91 = arith.constant 0 : index
    %c0_92 = arith.constant 0 : index
    %130 = vector.load %arg7[%c0_91, %c0_92] : memref<512x256xbf16, #tpu.memory_space<vmem>>, vector<512x256xbf16>
    %cst_93 = arith.constant dense<0.000000e+00> : vector<2x256xf32>
    %131 = tpu.matmul %129, %130, %cst_93 {dimension_numbers = #tpu.dot_dimension_numbers<[1], [0], [0], [1], [0, 0, 1, 1], [], []>} : vector<2x512xbf16>, vector<512x256xbf16>, vector<2x256xf32> -> vector<2x256xf32>
    %c0_94 = arith.constant 0 : index
    %c0_95 = arith.constant 0 : index
    %132 = vector.load %arg8[%c0_94, %c0_95] : memref<1x256xf32, #tpu.memory_space<vmem>>, vector<1x256xf32>
    %133 = vector.broadcast %132 : vector<1x256xf32> to vector<2x256xf32>
    %134 = arith.addf %131, %133 : vector<2x256xf32>
    %cst_96 = arith.constant 0.000000e+00 : f32
    %135 = vector.broadcast %cst_96 : f32 to vector<2x256xf32>
    %136 = arith.maximumf %134, %135 : vector<2x256xf32>
    %137 = arith.truncf %136 : vector<2x256xf32> to vector<2x256xbf16>
    %c0_97 = arith.constant 0 : index
    %c0_98 = arith.constant 0 : index
    %138 = vector.load %arg9[%c0_97, %c0_98] : memref<256x128xbf16, #tpu.memory_space<vmem>>, vector<256x128xbf16>
    %cst_99 = arith.constant dense<0.000000e+00> : vector<2x128xf32>
    %139 = tpu.matmul %137, %138, %cst_99 {dimension_numbers = #tpu.dot_dimension_numbers<[1], [0], [0], [1], [0, 0, 1, 1], [], []>} : vector<2x256xbf16>, vector<256x128xbf16>, vector<2x128xf32> -> vector<2x128xf32>
    %c0_100 = arith.constant 0 : index
    %c0_101 = arith.constant 0 : index
    %140 = vector.load %arg10[%c0_100, %c0_101] : memref<1x128xf32, #tpu.memory_space<vmem>>, vector<1x128xf32>
    %141 = vector.broadcast %140 : vector<1x128xf32> to vector<2x128xf32>
    %142 = arith.addf %139, %141 : vector<2x128xf32>
    %c0_102 = arith.constant 0 : index
    %c0_103 = arith.constant 0 : index
    %143 = vector.load %arg12[%c0_102, %c0_103] : memref<2x128xf32, #tpu.memory_space<vmem>>, vector<2x128xf32>
    tpu.vector_store %arg12[%c0_102, %c0_103], %142 {strides = array<i32>} : memref<2x128xf32, #tpu.memory_space<vmem>>, vector<2x128xf32>,
    return
  }
  func.func @transform_0(%arg0: i32) -> (i32, i32, i32) {
    %c0_i32 = arith.constant 0 : i32
    %c0_i32_0 = arith.constant 0 : i32
    %c0_i32_1 = arith.constant 0 : i32
    return %arg0, %c0_i32, %c0_i32_0 : i32, i32, i32
  }
  func.func @transform_1(%arg0: i32) -> (i32, i32, i32) {
    %c0_i32 = arith.constant 0 : i32
    %c0_i32_0 = arith.constant 0 : i32
    %c0_i32_1 = arith.constant 0 : i32
    %c0_i32_2 = arith.constant 0 : i32
    return %c0_i32, %c0_i32_0, %c0_i32_1 : i32, i32, i32
  }
  func.func @transform_2(%arg0: i32) -> (i32, i32) {
    %c0_i32 = arith.constant 0 : i32
    %c0_i32_0 = arith.constant 0 : i32
    %c0_i32_1 = arith.constant 0 : i32
    return %c0_i32, %c0_i32_0 : i32, i32
  }
  func.func @transform_3(%arg0: i32) -> (i32, i32) {
    %c0_i32 = arith.constant 0 : i32
    %c0_i32_0 = arith.constant 0 : i32
    %c0_i32_1 = arith.constant 0 : i32
    return %c0_i32, %c0_i32_0 : i32, i32
  }
  func.func @transform_4(%arg0: i32) -> (i32, i32) {
    %c0_i32 = arith.constant 0 : i32
    %c0_i32_0 = arith.constant 0 : i32
    %c0_i32_1 = arith.constant 0 : i32
    return %c0_i32, %c0_i32_0 : i32, i32
  }
  func.func @transform_5(%arg0: i32) -> (i32, i32) {
    %c0_i32 = arith.constant 0 : i32
    %c0_i32_0 = arith.constant 0 : i32
    %c0_i32_1 = arith.constant 0 : i32
    return %c0_i32, %c0_i32_0 : i32, i32
  }
  func.func @transform_6(%arg0: i32) -> (i32, i32) {
    %c0_i32 = arith.constant 0 : i32
    %c0_i32_0 = arith.constant 0 : i32
    %c0_i32_1 = arith.constant 0 : i32
    return %c0_i32, %c0_i32_0 : i32, i32
  }
  func.func @transform_7(%arg0: i32) -> (i32, i32) {
    %c0_i32 = arith.constant 0 : i32
    %c0_i32_0 = arith.constant 0 : i32
    %c0_i32_1 = arith.constant 0 : i32
    return %c0_i32, %c0_i32_0 : i32, i32
  }
  func.func @transform_8(%arg0: i32) -> (i32, i32) {
    %c0_i32 = arith.constant 0 : i32
    %c0_i32_0 = arith.constant 0 : i32
    %c0_i32_1 = arith.constant 0 : i32
    return %c0_i32, %c0_i32_0 : i32, i32
  }
  func.func @transform_9(%arg0: i32) -> (i32, i32) {
    %c0_i32 = arith.constant 0 : i32
    %c0_i32_0 = arith.constant 0 : i32
    %c0_i32_1 = arith.constant 0 : i32
    return %c0_i32, %c0_i32_0 : i32, i32
  }
  func.func @transform_10(%arg0: i32) -> (i32, i32) {
    %c0_i32 = arith.constant 0 : i32
    %c0_i32_0 = arith.constant 0 : i32
    return %arg0, %c0_i32 : i32, i32
  }
  func.func @transform_11(%arg0: i32) -> (i32, i32) {
    %c0_i32 = arith.constant 0 : i32
    %c0_i32_0 = arith.constant 0 : i32
    return %arg0, %c0_i32 : i32, i32
  }
}

</mosaic_0001>

<llo_original>
// kernel: _forward_parts.1
$region0: #{_forward_parts.1}
  #allocation0 [shape = 'u32[]', space=smem, size = 0x4, offset = 0x4, fixed_abs, tag = 'smem constant byte address 0x4 - core index']
  #allocation1 [shape = 'u32[144,128]{1,0:T(1,128)}', space=vmem, size = 0x12000, scoped, tag = 'internal scratch']
  #allocation2 [shape = 'f32[2,8]{1,0:T(2,128)}', space=vmem, size = 0x400, scoped, tag = 'scratch operand']
  %s0 = inlined_call_operand.vmem [shape: bf16[2,3,256], index: 0, kind: input, shape index: {}]
  %s1 = inlined_call_operand.vmem [shape: bf16[9,8,3], index: 1, kind: input, shape index: {}]
  %s2 = inlined_call_operand.vmem [shape: f32[8,1], index: 2, kind: input, shape index: {}]
  %s3 = inlined_call_operand.vmem [shape: f32[1,256], index: 3, kind: input, shape index: {}]
  %s4 = inlined_call_operand.vmem [shape: bf16[8,512], index: 4, kind: input, shape index: {}]
  %s5 = inlined_call_operand.vmem [shape: f32[1,512], index: 5, kind: input, shape index: {}]
  %s6 = inlined_call_operand.vmem [shape: bf16[512,256], index: 6, kind: input, shape index: {}]
  %s7 = inlined_call_operand.vmem [shape: f32[1,256], index: 7, kind: input, shape index: {}]
  %s8 = inlined_call_operand.vmem [shape: bf16[256,128], index: 8, kind: input, shape index: {}]
  %s9 = inlined_call_operand.vmem [shape: f32[1,128], index: 9, kind: input, shape index: {}]
  %s10 = inlined_call_operand.hbm [shape: f32[2,512], index: 10, kind: output, shape index: {0}]
  %s11 = inlined_call_operand.hbm [shape: f32[2,128], index: 11, kind: output, shape index: {1}]
  %12 = xla_tuple %s10, %s11
  %s13 = sld [smem:[#allocation0]]
  $region58: #{_forward_parts.1} parent=0
    _
  %s15 = ssub.s32 1, %s13
  %s16 = scalar_select 0, %s15, %s13
  $region1: #{_forward_parts.1} parent=0
    #allocation3 [shape = 'u8[4096]{0}', space=vmem, size = 0x1000, scoped, tag = 'output window, operand 0, single buffered']
    #allocation4 [shape = 's32[1]{0}', space=sflag, size = 0x4, scoped, tag = 'scoped memory for _forward_parts.1']
    #allocation5 [shape = 'u8[1024]{0}', space=vmem, size = 0x400, scoped, tag = 'output window, operand 1, single buffered']
    #allocation6 [shape = 's32[1]{0}', space=sflag, size = 0x4, scoped, tag = 'scoped memory for _forward_parts.1']
    %17 = vsyncpa [#allocation4], 0
    %18 = vsyncpa [#allocation6], 0
    // Predicated region
    $region2: #{_forward_parts.1} parent=1 // pred_check
      _
    $region3: #{_forward_parts.1} parent=1 // pred_check_branch
      %20 = sbr.rel (0) target = $region5
    $region4: #{_forward_parts.1} parent=1 // pred_region
      _
    $region5: #{_forward_parts.1} parent=1 // pred_fallthru
      _
    // Predicated region
    $region6: #{_forward_parts.1} parent=1 // pred_check
      _
    $region7: #{_forward_parts.1} parent=1 // pred_check_branch
      %22 = sbr.rel (0) target = $region9
    $region8: #{_forward_parts.1} parent=1 // pred_region
      _
    $region9: #{_forward_parts.1} parent=1 // pred_fallthru
      _
    // Predicated region
    $region10: #{_forward_parts.1} parent=1 // pred_check
      _
    $region11: #{_forward_parts.1} parent=1 // pred_check_branch
      %24 = sbr.rel (0) target = $region13
    $region12: #{_forward_parts.1} parent=1 // pred_region
      _
    $region13: #{_forward_parts.1} parent=1 // pred_fallthru
      _
    // Predicated region
    $region14: #{_forward_parts.1} parent=1 // pred_check
      _
    $region15: #{_forward_parts.1} parent=1 // pred_check_branch
      %26 = sbr.rel (0) target = $region17
    $region16: #{_forward_parts.1} parent=1 // pred_region
      _
    $region17: #{_forward_parts.1} parent=1 // pred_fallthru
      _
    // Predicated region
    $region18: #{_forward_parts.1} parent=1 // pred_check
      _
    $region19: #{_forward_parts.1} parent=1 // pred_check_branch
      %28 = sbr.rel (0) target = $region21
    $region20: #{_forward_parts.1} parent=1 // pred_region
      _
    $region21: #{_forward_parts.1} parent=1 // pred_fallthru
      _
    // Predicated region
    $region22: #{_forward_parts.1} parent=1 // pred_check
      _
    $region23: #{_forward_parts.1} parent=1 // pred_check_branch
      %30 = sbr.rel (0) target = $region25
    $region24: #{_forward_parts.1} parent=1 // pred_region
      _
    $region25: #{_forward_parts.1} parent=1 // pred_fallthru
      _
    // Predicated region
    $region26: #{_forward_parts.1} parent=1 // pred_check
      _
    $region27: #{_forward_parts.1} parent=1 // pred_check_branch
      %32 = sbr.rel (0) target = $region29
    $region28: #{_forward_parts.1} parent=1 // pred_region
      _
    $region29: #{_forward_parts.1} parent=1 // pred_fallthru
      _
    // Predicated region
    $region30: #{_forward_parts.1} parent=1 // pred_check
      _
    $region31: #{_forward_parts.1} parent=1 // pred_check_branch
      %34 = sbr.rel (0) target = $region33
    $region32: #{_forward_parts.1} parent=1 // pred_region
      _
    $region33: #{_forward_parts.1} parent=1 // pred_fallthru
      _
    // Predicated region
    $region34: #{_forward_parts.1} parent=1 // pred_check
      _
    $region35: #{_forward_parts.1} parent=1 // pred_check_branch
      %36 = sbr.rel (0) target = $region37
    $region36: #{_forward_parts.1} parent=1 // pred_region
      _
    $region37: #{_forward_parts.1} parent=1 // pred_fallthru
      _
    // Predicated region
    $region38: #{_forward_parts.1} parent=1 // pred_check
      _
    $region39: #{_forward_parts.1} parent=1 // pred_check_branch
      %38 = sbr.rel (0) target = $region41
    $region40: #{_forward_parts.1} parent=1 // pred_region
      _
    $region41: #{_forward_parts.1} parent=1 // pred_fallthru
      _
    %v40 = vld [vmem:[%s3] sm:$0x3]
    %v41 = vld [vmem:[%s2] sm:$0xff]
    %v42 = vld [vmem:[%s0] sm:$0xf]
    %v43 = vld [vmem:[%s1] sm:$0xf]
    %s44 = scalar_lea.vmem %s1, 4
    %v45 = vld [vmem:[%s44] sm:$0xf]
    %v48 = vunpack.c.l.s4 1983009808
    %v49 = vunpack.c.0.s8 %v48
    %v50 = vlaneseq
    %v51 = vshrl.u32 %v50, 7
    %v52 = vsub.s32 %v49, %v51
    %v53 = vrot.slane %v42, %v52
    %v54 = vcombine.high %v53, %v53
    %55 = vrot.lane.b32.xlu0 %v53, 127
    %v56 = vpop.permute.xlu0 %55
    %57 = vrot.lane.b32.xlu0 %v54, 127
    %v58 = vpop.permute.xlu0 %57
    %vm59 = vcmask 1039360
    %v60 = vsel %vm59, %v56, %v58
    %vm61 = vcmask 23552
    %v63 = vsel %vm61, %v45, 0
    %vm65 = vcmask 1040384
    %vm66 = vcmask 1041408
    %v67 = vsel %vm65, 4294967295, 65535
    %v68 = vsel %vm66, %v67, 0
    %v70 = vand.u32 %v60, %v68
    %v73 = vand.u32 %v58, %v68
    %75 = vmatprep.subr.bf16.mxu0 0
    %76 = vmatpush1.bf16.msra.mxu0 0
    %77 = vmatprep.subr.bf16.mxu0 0
    %78 = vmatpush1.bf16.msra.mxu0 0
    %79 = vmatprep.subr.bf16.mxu0 0
    %80 = vmatpush1.bf16.msra.mxu0 0
    %81 = vmatprep.subr.bf16.mxu0 0
    %82 = vmatpush1.bf16.msra.mxu0 0
    %83 = vmatprep.subr.bf16.mxu0 0
    %84 = vmatpush1.bf16.msra.mxu0 0
    %85 = vmatprep.subr.bf16.mxu0 0
    %86 = vmatpush1.bf16.msra.mxu0 0
    %87 = vmatprep.subr.bf16.mxu0 0
    %88 = vmatpush1.bf16.msra.mxu0 0
    %89 = vmatprep.subr.bf16.mxu0 %v73
    %90 = vmatpush1.bf16.msra.mxu0 %v70
    %91 = vmatprep.subr.bf16.mxu0 0
    %92 = vmatpush2.bf16.msra.mxu0 0
    %93 = vmatprep.subr.bf16.mxu0 0
    %94 = vmatpush2.bf16.msra.mxu0 0
    %95 = vmatprep.subr.bf16.mxu0 0
    %96 = vmatpush2.bf16.msra.mxu0 0
    %97 = vmatprep.subr.bf16.mxu0 0
    %98 = vmatpush2.bf16.msra.mxu0 0
    %99 = vmatprep.subr.bf16.mxu0 0
    %100 = vmatpush2.bf16.msra.mxu0 0
    %101 = vmatprep.subr.bf16.mxu0 0
    %102 = vmatpush2.bf16.msra.mxu0 0
    %103 = vmatprep.subr.bf16.mxu0 0
    %104 = vmatpush2.bf16.msra.mxu0 0
    %105 = vmatprep.subr.bf16.mxu0 0
    %106 = vmatpush2.bf16.msra.mxu0 0
    %107 = vmatprep.mubr.bf16.mxu0 0
    %108 = vmatmul.mubr.bf16.gmra.mxu0 %v63
    %v109 = vpop.f32.mrf.mxu0
    %v110 = vadd.f32 0.0, %v109
    %v111 = vpop.f32.mrf.mxu0
    %v112 = vadd.f32 0.0, %v111
    %v113 = vpop.f32.mrf.mxu0
    %v114 = vpop.f32.mrf.mxu0
    %115 = vdwg.mxu0
    %v117 = vsel %vm61, %v43, 0
    %v120 = vand.u32 %v53, %v68
    %v123 = vand.u32 %v54, %v68
    %125 = vmatprep.subr.bf16.mxu0 0
    %126 = vmatpush1.bf16.msra.mxu0 0
    %127 = vmatprep.subr.bf16.mxu0 0
    %128 = vmatpush1.bf16.msra.mxu0 0
    %129 = vmatprep.subr.bf16.mxu0 0
    %130 = vmatpush1.bf16.msra.mxu0 0
    %131 = vmatprep.subr.bf16.mxu0 0
    %132 = vmatpush1.bf16.msra.mxu0 0
    %133 = vmatprep.subr.bf16.mxu0 0
    %134 = vmatpush1.bf16.msra.mxu0 0
    %135 = vmatprep.subr.bf16.mxu0 0
    %136 = vmatpush1.bf16.msra.mxu0 0
    %137 = vmatprep.subr.bf16.mxu0 0
    %138 = vmatpush1.bf16.msra.mxu0 0
    %139 = vmatprep.subr.bf16.mxu0 %v123
    %140 = vmatpush1.bf16.msra.mxu0 %v120
    %141 = vmatprep.subr.bf16.mxu0 0
    %142 = vmatpush2.bf16.msra.mxu0 0
    %143 = vmatprep.subr.bf16.mxu0 0
    %144 = vmatpush2.bf16.msra.mxu0 0
    %145 = vmatprep.subr.bf16.mxu0 0
    %146 = vmatpush2.bf16.msra.mxu0 0
    %147 = vmatprep.subr.bf16.mxu0 0
    %148 = vmatpush2.bf16.msra.mxu0 0
    %149 = vmatprep.subr.bf16.mxu0 0
    %150 = vmatpush2.bf16.msra.mxu0 0
    %151 = vmatprep.subr.bf16.mxu0 0
    %152 = vmatpush2.bf16.msra.mxu0 0
    %153 = vmatprep.subr.bf16.mxu0 0
    %154 = vmatpush2.bf16.msra.mxu0 0
    %155 = vmatprep.subr.bf16.mxu0 0
    %156 = vmatpush2.bf16.msra.mxu0 0
    %157 = vmatprep.mubr.bf16.mxu0 0
    %158 = vmatmul.mubr.bf16.gmra.mxu0 %v117
    %v159 = vpop.f32.mrf.mxu0
    %v160 = vadd.f32 %v110, %v159
    %v161 = vpop.f32.mrf.mxu0
    %v162 = vadd.f32 %v112, %v161
    %v163 = vpop.f32.mrf.mxu0
    %v164 = vpop.f32.mrf.mxu0
    %165 = vdwg.mxu0
    %s166 = scalar_lea.vmem %s1, 8
    %v167 = vld [vmem:[%s166] sm:$0xf]
    %168 = vrot.lane.b32.xlu0 %v53, 126
    %v169 = vpop.permute.xlu0 %168
    %170 = vrot.lane.b32.xlu0 %v54, 126
    %v171 = vpop.permute.xlu0 %170
    %vm172 = vcmask 1031168
    %v173 = vsel %vm172, %v169, %v171
    %v175 = vsel %vm61, %v167, 0
    %v178 = vand.u32 %v173, %v68
    %v181 = vand.u32 %v171, %v68
    %183 = vmatprep.subr.bf16.mxu0 0
    %184 = vmatpush1.bf16.msra.mxu0 0
    %185 = vmatprep.subr.bf16.mxu0 0
    %186 = vmatpush1.bf16.msra.mxu0 0
    %187 = vmatprep.subr.bf16.mxu0 0
    %188 = vmatpush1.bf16.msra.mxu0 0
    %189 = vmatprep.subr.bf16.mxu0 0
    %190 = vmatpush1.bf16.msra.mxu0 0
    %191 = vmatprep.subr.bf16.mxu0 0
    %192 = vmatpush1.bf16.msra.mxu0 0
    %193 = vmatprep.subr.bf16.mxu0 0
    %194 = vmatpush1.bf16.msra.mxu0 0
    %195 = vmatprep.subr.bf16.mxu0 0
    %196 = vmatpush1.bf16.msra.mxu0 0
    %197 = vmatprep.subr.bf16.mxu0 %v181
    %198 = vmatpush1.bf16.msra.mxu0 %v178
    %199 = vmatprep.subr.bf16.mxu0 0
    %200 = vmatpush2.bf16.msra.mxu0 0
    %201 = vmatprep.subr.bf16.mxu0 0
    %202 = vmatpush2.bf16.msra.mxu0 0
    %203 = vmatprep.subr.bf16.mxu0 0
    %204 = vmatpush2.bf16.msra.mxu0 0
    %205 = vmatprep.subr.bf16.mxu0 0
    %206 = vmatpush2.bf16.msra.mxu0 0
    %207 = vmatprep.subr.bf16.mxu0 0
    %208 = vmatpush2.bf16.msra.mxu0 0
    %209 = vmatprep.subr.bf16.mxu0 0
    %210 = vmatpush2.bf16.msra.mxu0 0
    %211 = vmatprep.subr.bf16.mxu0 0
    %212 = vmatpush2.bf16.msra.mxu0 0
    %213 = vmatprep.subr.bf16.mxu0 0
    %214 = vmatpush2.bf16.msra.mxu0 0
    %215 = vmatprep.mubr.bf16.mxu0 0
    %216 = vmatmul.mubr.bf16.gmra.mxu0 %v175
    %v217 = vpop.f32.mrf.mxu0
    %v218 = vadd.f32 0.0, %v217
    %v219 = vpop.f32.mrf.mxu0
    %v220 = vadd.f32 0.0, %v219
    %v221 = vpop.f32.mrf.mxu0
    %v222 = vpop.f32.mrf.mxu0
    %223 = vdwg.mxu0
    %v224 = vadd.f32 %v160, %v218
    %v225 = vadd.f32 %v162, %v220
    %s226 = scalar_lea.vmem %s1, 12
    %v227 = vld [vmem:[%s226] sm:$0xf]
    %228 = vrot.lane.b32.xlu0 %v53, 112
    %v229 = vpop.permute.xlu0 %228
    %230 = vrot.lane.b32.xlu0 %v54, 112
    %v231 = vpop.permute.xlu0 %230
    %vm232 = vcmask 916480
    %v233 = vsel %vm232, %v229, %v231
    %v235 = vsel %vm61, %v227, 0
    %v238 = vand.u32 %v233, %v68
    %v241 = vand.u32 %v231, %v68
    %243 = vmatprep.subr.bf16.mxu0 0
    %244 = vmatpush1.bf16.msra.mxu0 0
    %245 = vmatprep.subr.bf16.mxu0 0
    %246 = vmatpush1.bf16.msra.mxu0 0
    %247 = vmatprep.subr.bf16.mxu0 0
    %248 = vmatpush1.bf16.msra.mxu0 0
    %249 = vmatprep.subr.bf16.mxu0 0
    %250 = vmatpush1.bf16.msra.mxu0 0
    %251 = vmatprep.subr.bf16.mxu0 0
    %252 = vmatpush1.bf16.msra.mxu0 0
    %253 = vmatprep.subr.bf16.mxu0 0
    %254 = vmatpush1.bf16.msra.mxu0 0
    %255 = vmatprep.subr.bf16.mxu0 0
    %256 = vmatpush1.bf16.msra.mxu0 0
    %257 = vmatprep.subr.bf16.mxu0 %v241
    %258 = vmatpush1.bf16.msra.mxu0 %v238
    %259 = vmatprep.subr.bf16.mxu0 0
    %260 = vmatpush2.bf16.msra.mxu0 0
    %261 = vmatprep.subr.bf16.mxu0 0
    %262 = vmatpush2.bf16.msra.mxu0 0
    %263 = vmatprep.subr.bf16.mxu0 0
    %264 = vmatpush2.bf16.msra.mxu0 0
    %265 = vmatprep.subr.bf16.mxu0 0
    %266 = vmatpush2.bf16.msra.mxu0 0
    %267 = vmatprep.subr.bf16.mxu0 0
    %268 = vmatpush2.bf16.msra.mxu0 0
    %269 = vmatprep.subr.bf16.mxu0 0
    %270 = vmatpush2.bf16.msra.mxu0 0
    %271 = vmatprep.subr.bf16.mxu0 0
    %272 = vmatpush2.bf16.msra.mxu0 0
    %273 = vmatprep.subr.bf16.mxu0 0
    %274 = vmatpush2.bf16.msra.mxu0 0
    %275 = vmatprep.mubr.bf16.mxu0 0
    %276 = vmatmul.mubr.bf16.gmra.mxu0 %v235
    %v277 = vpop.f32.mrf.mxu0
    %v278 = vadd.f32 0.0, %v277
    %v279 = vpop.f32.mrf.mxu0
    %v280 = vadd.f32 0.0, %v279
    %v281 = vpop.f32.mrf.mxu0
    %v282 = vpop.f32.mrf.mxu0
    %283 = vdwg.mxu0
    %v284 = vadd.f32 %v224, %v278
    %v285 = vadd.f32 %v225, %v280
    %s286 = scalar_lea.vmem %s1, 16
    %v287 = vld [vmem:[%s286] sm:$0xf]
    %288 = vrot.lane.b32.xlu0 %v53, 111
    %v289 = vpop.permute.xlu0 %288
    %290 = vrot.lane.b32.xlu0 %v54, 111
    %v291 = vpop.permute.xlu0 %290
    %vm292 = vcmask 908288
    %v293 = vsel %vm292, %v289, %v291
    %v295 = vsel %vm61, %v287, 0
    %v298 = vand.u32 %v293, %v68
    %v301 = vand.u32 %v291, %v68
    %303 = vmatprep.subr.bf16.mxu0 0
    %304 = vmatpush1.bf16.msra.mxu0 0
    %305 = vmatprep.subr.bf16.mxu0 0
    %306 = vmatpush1.bf16.msra.mxu0 0
    %307 = vmatprep.subr.bf16.mxu0 0
    %308 = vmatpush1.bf16.msra.mxu0 0
    %309 = vmatprep.subr.bf16.mxu0 0
    %310 = vmatpush1.bf16.msra.mxu0 0
    %311 = vmatprep.subr.bf16.mxu0 0
    %312 = vmatpush1.bf16.msra.mxu0 0
    %313 = vmatprep.subr.bf16.mxu0 0
    %314 = vmatpush1.bf16.msra.mxu0 0
    %315 = vmatprep.subr.bf16.mxu0 0
    %316 = vmatpush1.bf16.msra.mxu0 0
    %317 = vmatprep.subr.bf16.mxu0 %v301
    %318 = vmatpush1.bf16.msra.mxu0 %v298
    %319 = vmatprep.subr.bf16.mxu0 0
    %320 = vmatpush2.bf16.msra.mxu0 0
    %321 = vmatprep.subr.bf16.mxu0 0
    %322 = vmatpush2.bf16.msra.mxu0 0
    %323 = vmatprep.subr.bf16.mxu0 0
    %324 = vmatpush2.bf16.msra.mxu0 0
    %325 = vmatprep.subr.bf16.mxu0 0
    %326 = vmatpush2.bf16.msra.mxu0 0
    %327 = vmatprep.subr.bf16.mxu0 0
    %328 = vmatpush2.bf16.msra.mxu0 0
    %329 = vmatprep.subr.bf16.mxu0 0
    %330 = vmatpush2.bf16.msra.mxu0 0
    %331 = vmatprep.subr.bf16.mxu0 0
    %332 = vmatpush2.bf16.msra.mxu0 0
    %333 = vmatprep.subr.bf16.mxu0 0
    %334 = vmatpush2.bf16.msra.mxu0 0
    %335 = vmatprep.mubr.bf16.mxu0 0
    %336 = vmatmul.mubr.bf16.gmra.mxu0 %v295
    %v337 = vpop.f32.mrf.mxu0
    %v338 = vadd.f32 0.0, %v337
    %v339 = vpop.f32.mrf.mxu0
    %v340 = vadd.f32 0.0, %v339
    %v341 = vpop.f32.mrf.mxu0
    %v342 = vpop.f32.mrf.mxu0
    %343 = vdwg.mxu0
    %v344 = vadd.f32 %v284, %v338
    %v345 = vadd.f32 %v285, %v340
    %s346 = scalar_lea.vmem %s1, 20
    %v347 = vld [vmem:[%s346] sm:$0xf]
    %348 = vrot.lane.b32.xlu0 %v53, 110
    %v349 = vpop.permute.xlu0 %348
    %350 = vrot.lane.b32.xlu0 %v54, 110
    %v351 = vpop.permute.xlu0 %350
    %vm352 = vcmask 900096
    %v353 = vsel %vm352, %v349, %v351
    %v355 = vsel %vm61, %v347, 0
    %v358 = vand.u32 %v353, %v68
    %v361 = vand.u32 %v351, %v68
    %363 = vmatprep.subr.bf16.mxu0 0
    %364 = vmatpush1.bf16.msra.mxu0 0
    %365 = vmatprep.subr.bf16.mxu0 0
    %366 = vmatpush1.bf16.msra.mxu0 0
    %367 = vmatprep.subr.bf16.mxu0 0
    %368 = vmatpush1.bf16.msra.mxu0 0
    %369 = vmatprep.subr.bf16.mxu0 0
    %370 = vmatpush1.bf16.msra.mxu0 0
    %371 = vmatprep.subr.bf16.mxu0 0
    %372 = vmatpush1.bf16.msra.mxu0 0
    %373 = vmatprep.subr.bf16.mxu0 0
    %374 = vmatpush1.bf16.msra.mxu0 0
    %375 = vmatprep.subr.bf16.mxu0 0
    %376 = vmatpush1.bf16.msra.mxu0 0
    %377 = vmatprep.subr.bf16.mxu0 %v361
    %378 = vmatpush1.bf16.msra.mxu0 %v358
    %379 = vmatprep.subr.bf16.mxu0 0
    %380 = vmatpush2.bf16.msra.mxu0 0
    %381 = vmatprep.subr.bf16.mxu0 0
    %382 = vmatpush2.bf16.msra.mxu0 0
    %383 = vmatprep.subr.bf16.mxu0 0
    %384 = vmatpush2.bf16.msra.mxu0 0
    %385 = vmatprep.subr.bf16.mxu0 0
    %386 = vmatpush2.bf16.msra.mxu0 0
    %387 = vmatprep.subr.bf16.mxu0 0
    %388 = vmatpush2.bf16.msra.mxu0 0
    %389 = vmatprep.subr.bf16.mxu0 0
    %390 = vmatpush2.bf16.msra.mxu0 0
    %391 = vmatprep.subr.bf16.mxu0 0
    %392 = vmatpush2.bf16.msra.mxu0 0
    %393 = vmatprep.subr.bf16.mxu0 0
    %394 = vmatpush2.bf16.msra.mxu0 0
    %395 = vmatprep.mubr.bf16.mxu0 0
    %396 = vmatmul.mubr.bf16.gmra.mxu0 %v355
    %v397 = vpop.f32.mrf.mxu0
    %v398 = vadd.f32 0.0, %v397
    %v399 = vpop.f32.mrf.mxu0
    %v400 = vadd.f32 0.0, %v399
    %v401 = vpop.f32.mrf.mxu0
    %v402 = vpop.f32.mrf.mxu0
    %403 = vdwg.mxu0
    %v404 = vadd.f32 %v344, %v398
    %v405 = vadd.f32 %v345, %v400
    %s406 = scalar_lea.vmem %s1, 24
    %v407 = vld [vmem:[%s406] sm:$0xf]
    %408 = vrot.lane.b32.xlu0 %v53, 96
    %v409 = vpop.permute.xlu0 %408
    %410 = vrot.lane.b32.xlu0 %v54, 96
    %v411 = vpop.permute.xlu0 %410
    %vm412 = vcmask 785408
    %v413 = vsel %vm412, %v409, %v411
    %v415 = vsel %vm61, %v407, 0
    %v418 = vand.u32 %v413, %v68
    %v421 = vand.u32 %v411, %v68
    %423 = vmatprep.subr.bf16.mxu0 0
    %424 = vmatpush1.bf16.msra.mxu0 0
    %425 = vmatprep.subr.bf16.mxu0 0
    %426 = vmatpush1.bf16.msra.mxu0 0
    %427 = vmatprep.subr.bf16.mxu0 0
    %428 = vmatpush1.bf16.msra.mxu0 0
    %429 = vmatprep.subr.bf16.mxu0 0
    %430 = vmatpush1.bf16.msra.mxu0 0
    %431 = vmatprep.subr.bf16.mxu0 0
    %432 = vmatpush1.bf16.msra.mxu0 0
    %433 = vmatprep.subr.bf16.mxu0 0
    %434 = vmatpush1.bf16.msra.mxu0 0
    %435 = vmatprep.subr.bf16.mxu0 0
    %436 = vmatpush1.bf16.msra.mxu0 0
    %437 = vmatprep.subr.bf16.mxu0 %v421
    %438 = vmatpush1.bf16.msra.mxu0 %v418
    %439 = vmatprep.subr.bf16.mxu0 0
    %440 = vmatpush2.bf16.msra.mxu0 0
    %441 = vmatprep.subr.bf16.mxu0 0
    %442 = vmatpush2.bf16.msra.mxu0 0
    %443 = vmatprep.subr.bf16.mxu0 0
    %444 = vmatpush2.bf16.msra.mxu0 0
    %445 = vmatprep.subr.bf16.mxu0 0
    %446 = vmatpush2.bf16.msra.mxu0 0
    %447 = vmatprep.subr.bf16.mxu0 0
    %448 = vmatpush2.bf16.msra.mxu0 0
    %449 = vmatprep.subr.bf16.mxu0 0
    %450 = vmatpush2.bf16.msra.mxu0 0
    %451 = vmatprep.subr.bf16.mxu0 0
    %452 = vmatpush2.bf16.msra.mxu0 0
    %453 = vmatprep.subr.bf16.mxu0 0
    %454 = vmatpush2.bf16.msra.mxu0 0
    %455 = vmatprep.mubr.bf16.mxu0 0
    %456 = vmatmul.mubr.bf16.gmra.mxu0 %v415
    %v457 = vpop.f32.mrf.mxu0
    %v458 = vadd.f32 0.0, %v457
    %v459 = vpop.f32.mrf.mxu0
    %v460 = vadd.f32 0.0, %v459
    %v461 = vpop.f32.mrf.mxu0
    %v462 = vpop.f32.mrf.mxu0
    %463 = vdwg.mxu0
    %v464 = vadd.f32 %v404, %v458
    %v465 = vadd.f32 %v405, %v460
    %s466 = scalar_lea.vmem %s1, 28
    %v467 = vld [vmem:[%s466] sm:$0xf]
    %468 = vrot.lane.b32.xlu0 %v53, 95
    %v469 = vpop.permute.xlu0 %468
    %470 = vrot.lane.b32.xlu0 %v54, 95
    %v471 = vpop.permute.xlu0 %470
    %vm472 = vcmask 777216
    %v473 = vsel %vm472, %v469, %v471
    %v475 = vsel %vm61, %v467, 0
    %v478 = vand.u32 %v473, %v68
    %v481 = vand.u32 %v471, %v68
    %483 = vmatprep.subr.bf16.mxu0 0
    %484 = vmatpush1.bf16.msra.mxu0 0
    %485 = vmatprep.subr.bf16.mxu0 0
    %486 = vmatpush1.bf16.msra.mxu0 0
    %487 = vmatprep.subr.bf16.mxu0 0
    %488 = vmatpush1.bf16.msra.mxu0 0
    %489 = vmatprep.subr.bf16.mxu0 0
    %490 = vmatpush1.bf16.msra.mxu0 0
    %491 = vmatprep.subr.bf16.mxu0 0
    %492 = vmatpush1.bf16.msra.mxu0 0
    %493 = vmatprep.subr.bf16.mxu0 0
    %494 = vmatpush1.bf16.msra.mxu0 0
    %495 = vmatprep.subr.bf16.mxu0 0
    %496 = vmatpush1.bf16.msra.mxu0 0
    %497 = vmatprep.subr.bf16.mxu0 %v481
    %498 = vmatpush1.bf16.msra.mxu0 %v478
    %499 = vmatprep.subr.bf16.mxu0 0
    %500 = vmatpush2.bf16.msra.mxu0 0
    %501 = vmatprep.subr.bf16.mxu0 0
    %502 = vmatpush2.bf16.msra.mxu0 0
    %503 = vmatprep.subr.bf16.mxu0 0
    %504 = vmatpush2.bf16.msra.mxu0 0
    %505 = vmatprep.subr.bf16.mxu0 0
    %506 = vmatpush2.bf16.msra.mxu0 0
    %507 = vmatprep.subr.bf16.mxu0 0
    %508 = vmatpush2.bf16.msra.mxu0 0
    %509 = vmatprep.subr.bf16.mxu0 0
    %510 = vmatpush2.bf16.msra.mxu0 0
    %511 = vmatprep.subr.bf16.mxu0 0
    %512 = vmatpush2.bf16.msra.mxu0 0
    %513 = vmatprep.subr.bf16.mxu0 0
    %514 = vmatpush2.bf16.msra.mxu0 0
    %515 = vmatprep.mubr.bf16.mxu0 0
    %516 = vmatmul.mubr.bf16.gmra.mxu0 %v475
    %v517 = vpop.f32.mrf.mxu0
    %v518 = vadd.f32 0.0, %v517
    %v519 = vpop.f32.mrf.mxu0
    %v520 = vadd.f32 0.0, %v519
    %v521 = vpop.f32.mrf.mxu0
    %v522 = vpop.f32.mrf.mxu0
    %523 = vdwg.mxu0
    %v524 = vadd.f32 %v464, %v518
    %v525 = vadd.f32 %v465, %v520
    %s526 = scalar_lea.vmem %s1, 32
    %v527 = vld [vmem:[%s526] sm:$0xf]
    %528 = vrot.lane.b32.xlu0 %v53, 94
    %v529 = vpop.permute.xlu0 %528
    %530 = vrot.lane.b32.xlu0 %v54, 94
    %v531 = vpop.permute.xlu0 %530
    %vm532 = vcmask 769024
    %v533 = vsel %vm532, %v529, %v531
    %v535 = vsel %vm61, %v527, 0
    %v538 = vand.u32 %v533, %v68
    %v541 = vand.u32 %v531, %v68
    %543 = vmatprep.subr.bf16.mxu0 0
    %544 = vmatpush1.bf16.msra.mxu0 0
    %545 = vmatprep.subr.bf16.mxu0 0
    %546 = vmatpush1.bf16.msra.mxu0 0
    %547 = vmatprep.subr.bf16.mxu0 0
    %548 = vmatpush1.bf16.msra.mxu0 0
    %549 = vmatprep.subr.bf16.mxu0 0
    %550 = vmatpush1.bf16.msra.mxu0 0
    %551 = vmatprep.subr.bf16.mxu0 0
    %552 = vmatpush1.bf16.msra.mxu0 0
    %553 = vmatprep.subr.bf16.mxu0 0
    %554 = vmatpush1.bf16.msra.mxu0 0
    %555 = vmatprep.subr.bf16.mxu0 0
    %556 = vmatpush1.bf16.msra.mxu0 0
    %557 = vmatprep.subr.bf16.mxu0 %v541
    %558 = vmatpush1.bf16.msra.mxu0 %v538
    %559 = vmatprep.subr.bf16.mxu0 0
    %560 = vmatpush2.bf16.msra.mxu0 0
    %561 = vmatprep.subr.bf16.mxu0 0
    %562 = vmatpush2.bf16.msra.mxu0 0
    %563 = vmatprep.subr.bf16.mxu0 0
    %564 = vmatpush2.bf16.msra.mxu0 0
    %565 = vmatprep.subr.bf16.mxu0 0
    %566 = vmatpush2.bf16.msra.mxu0 0
    %567 = vmatprep.subr.bf16.mxu0 0
    %568 = vmatpush2.bf16.msra.mxu0 0
    %569 = vmatprep.subr.bf16.mxu0 0
    %570 = vmatpush2.bf16.msra.mxu0 0
    %571 = vmatprep.subr.bf16.mxu0 0
    %572 = vmatpush2.bf16.msra.mxu0 0
    %573 = vmatprep.subr.bf16.mxu0 0
    %574 = vmatpush2.bf16.msra.mxu0 0
    %575 = vmatprep.mubr.bf16.mxu0 0
    %576 = vmatmul.mubr.bf16.gmra.mxu0 %v535
    %v577 = vpop.f32.mrf.mxu0
    %v578 = vadd.f32 0.0, %v577
    %v579 = vpop.f32.mrf.mxu0
    %v580 = vadd.f32 0.0, %v579
    %v581 = vpop.f32.mrf.mxu0
    %v582 = vpop.f32.mrf.mxu0
    %583 = vdwg.mxu0
    %v584 = vadd.f32 %v524, %v578
    %v585 = vadd.f32 %v525, %v580
    %587 = vset.pattern.permute.xlu0 0
    %588 = vperm.xlu0 %587, %v41
    %v589 = vpop.permute.xlu0 %588
    %v591 = vadd.f32 %v584, %v589
    %v592 = vadd.f32 %v585, %v589
    %v593 = vmax.f32 %v591, 0.0
    %v594 = vmax.f32 %v592, 0.0
    %v596 = vlaneseq
    %v597 = vshrl.u32 %v596, 7
    %v598 = vsub.s32 0, %v597
    %v599 = vrot.slane %v40, %v598
    %v600 = vlaneseq
    %v601 = vshrl.u32 %v600, 7
    %v602 = vsub.s32 1, %v601
    %v603 = vrot.slane %v40, %v602
    %v606 = vmul.f32 %v593, %v599
    %v607 = vmul.f32 %v594, %v603
    %vm608 = vcmask 769024
    %v609 = vsel %vm608, %v607, 0.0
    %v610 = vadd.f32 %v606, %v609
    %611 = vadd.xlane.f32.xlu0 %v610
    %v612 = vpop.xlane.xlu0 %611
    %v614 = vlaneseq
    %v615 = vand.u32 %v614, 127
    %v616 = vlaneseq
    %v617 = vshrl.u32 %v616, 7
    %v618 = vsub.s32 %v615, %v617
    %v619 = vrot.slane %v612, %v618
    %vm621 = vcmask 57344
    %622 = vst.msk [vmem:[#allocation2] sm:$0x1] %vm621, %v619
    %s623 = scalar_lea.vmem %s0, 4
    %v624 = vld [vmem:[%s623] sm:$0xf]
    %v625 = vld [vmem:[%s1] sm:$0xf]
    %v626 = vld [vmem:[%s44] sm:$0xf]
    %v629 = vunpack.c.l.s4 1983009808
    %v630 = vunpack.c.0.s8 %v629
    %v631 = vlaneseq
    %v632 = vshrl.u32 %v631, 7
    %v633 = vsub.s32 %v630, %v632
    %v634 = vrot.slane %v624, %v633
    %v635 = vcombine.high %v634, %v634
    %636 = vrot.lane.b32.xlu0 %v634, 127
    %v637 = vpop.permute.xlu0 %636
    %638 = vrot.lane.b32.xlu0 %v635, 127
    %v639 = vpop.permute.xlu0 %638
    %v640 = vsel %vm59, %v637, %v639
    %v642 = vsel %vm61, %v626, 0
    %v645 = vand.u32 %v640, %v68
    %v648 = vand.u32 %v639, %v68
    %650 = vmatprep.subr.bf16.mxu0 0
    %651 = vmatpush1.bf16.msra.mxu0 0
    %652 = vmatprep.subr.bf16.mxu0 0
    %653 = vmatpush1.bf16.msra.mxu0 0
    %654 = vmatprep.subr.bf16.mxu0 0
    %655 = vmatpush1.bf16.msra.mxu0 0
    %656 = vmatprep.subr.bf16.mxu0 0
    %657 = vmatpush1.bf16.msra.mxu0 0
    %658 = vmatprep.subr.bf16.mxu0 0
    %659 = vmatpush1.bf16.msra.mxu0 0
    %660 = vmatprep.subr.bf16.mxu0 0
    %661 = vmatpush1.bf16.msra.mxu0 0
    %662 = vmatprep.subr.bf16.mxu0 0
    %663 = vmatpush1.bf16.msra.mxu0 0
    %664 = vmatprep.subr.bf16.mxu0 %v648
    %665 = vmatpush1.bf16.msra.mxu0 %v645
    %666 = vmatprep.subr.bf16.mxu0 0
    %667 = vmatpush2.bf16.msra.mxu0 0
    %668 = vmatprep.subr.bf16.mxu0 0
    %669 = vmatpush2.bf16.msra.mxu0 0
    %670 = vmatprep.subr.bf16.mxu0 0
    %671 = vmatpush2.bf16.msra.mxu0 0
    %672 = vmatprep.subr.bf16.mxu0 0
    %673 = vmatpush2.bf16.msra.mxu0 0
    %674 = vmatprep.subr.bf16.mxu0 0
    %675 = vmatpush2.bf16.msra.mxu0 0
    %676 = vmatprep.subr.bf16.mxu0 0
    %677 = vmatpush2.bf16.msra.mxu0 0
    %678 = vmatprep.subr.bf16.mxu0 0
    %679 = vmatpush2.bf16.msra.mxu0 0
    %680 = vmatprep.subr.bf16.mxu0 0
    %681 = vmatpush2.bf16.msra.mxu0 0
    %682 = vmatprep.mubr.bf16.mxu0 0
    %683 = vmatmul.mubr.bf16.gmra.mxu0 %v642
    %v684 = vpop.f32.mrf.mxu0
    %v685 = vadd.f32 0.0, %v684
    %v686 = vpop.f32.mrf.mxu0
    %v687 = vadd.f32 0.0, %v686
    %v688 = vpop.f32.mrf.mxu0
    %v689 = vpop.f32.mrf.mxu0
    %690 = vdwg.mxu0
    %v692 = vsel %vm61, %v625, 0
    %v695 = vand.u32 %v634, %v68
    %v698 = vand.u32 %v635, %v68
    %700 = vmatprep.subr.bf16.mxu0 0
    %701 = vmatpush1.bf16.msra.mxu0 0
    %702 = vmatprep.subr.bf16.mxu0 0
    %703 = vmatpush1.bf16.msra.mxu0 0
    %704 = vmatprep.subr.bf16.mxu0 0
    %705 = vmatpush1.bf16.msra.mxu0 0
    %706 = vmatprep.subr.bf16.mxu0 0
    %707 = vmatpush1.bf16.msra.mxu0 0
    %708 = vmatprep.subr.bf16.mxu0 0
    %709 = vmatpush1.bf16.msra.mxu0 0
    %710 = vmatprep.subr.bf16.mxu0 0
    %711 = vmatpush1.bf16.msra.mxu0 0
    %712 = vmatprep.subr.bf16.mxu0 0
    %713 = vmatpush1.bf16.msra.mxu0 0
    %714 = vmatprep.subr.bf16.mxu0 %v698
    %715 = vmatpush1.bf16.msra.mxu0 %v695
    %716 = vmatprep.subr.bf16.mxu0 0
    %717 = vmatpush2.bf16.msra.mxu0 0
    %718 = vmatprep.subr.bf16.mxu0 0
    %719 = vmatpush2.bf16.msra.mxu0 0
    %720 = vmatprep.subr.bf16.mxu0 0
    %721 = vmatpush2.bf16.msra.mxu0 0
    %722 = vmatprep.subr.bf16.mxu0 0
    %723 = vmatpush2.bf16.msra.mxu0 0
    %724 = vmatprep.subr.bf16.mxu0 0
    %725 = vmatpush2.bf16.msra.mxu0 0
    %726 = vmatprep.subr.bf16.mxu0 0
    %727 = vmatpush2.bf16.msra.mxu0 0
    %728 = vmatprep.subr.bf16.mxu0 0
    %729 = vmatpush2.bf16.msra.mxu0 0
    %730 = vmatprep.subr.bf16.mxu0 0
    %731 = vmatpush2.bf16.msra.mxu0 0
    %732 = vmatprep.mubr.bf16.mxu0 0
    %733 = vmatmul.mubr.bf16.gmra.mxu0 %v692
    %v734 = vpop.f32.mrf.mxu0
    %v735 = vadd.f32 %v685, %v734
    %v736 = vpop.f32.mrf.mxu0
    %v737 = vadd.f32 %v687, %v736
    %v738 = vpop.f32.mrf.mxu0
    %v739 = vpop.f32.mrf.mxu0
    %740 = vdwg.mxu0
    %v741 = vld [vmem:[%s166] sm:$0xf]
    %742 = vrot.lane.b32.xlu0 %v634, 126
    %v743 = vpop.permute.xlu0 %742
    %744 = vrot.lane.b32.xlu0 %v635, 126
    %v745 = vpop.permute.xlu0 %744
    %v746 = vsel %vm172, %v743, %v745
    %v748 = vsel %vm61, %v741, 0
    %v751 = vand.u32 %v746, %v68
    %v754 = vand.u32 %v745, %v68
    %756 = vmatprep.subr.bf16.mxu0 0
    %757 = vmatpush1.bf16.msra.mxu0 0
    %758 = vmatprep.subr.bf16.mxu0 0
    %759 = vmatpush1.bf16.msra.mxu0 0
    %760 = vmatprep.subr.bf16.mxu0 0
    %761 = vmatpush1.bf16.msra.mxu0 0
    %762 = vmatprep.subr.bf16.mxu0 0
    %763 = vmatpush1.bf16.msra.mxu0 0
    %764 = vmatprep.subr.bf16.mxu0 0
    %765 = vmatpush1.bf16.msra.mxu0 0
    %766 = vmatprep.subr.bf16.mxu0 0
    %767 = vmatpush1.bf16.msra.mxu0 0
    %768 = vmatprep.subr.bf16.mxu0 0
    %769 = vmatpush1.bf16.msra.mxu0 0
    %770 = vmatprep.subr.bf16.mxu0 %v754
    %771 = vmatpush1.bf16.msra.mxu0 %v751
    %772 = vmatprep.subr.bf16.mxu0 0
    %773 = vmatpush2.bf16.msra.mxu0 0
    %774 = vmatprep.subr.bf16.mxu0 0
    %775 = vmatpush2.bf16.msra.mxu0 0
    %776 = vmatprep.subr.bf16.mxu0 0
    %777 = vmatpush2.bf16.msra.mxu0 0
    %778 = vmatprep.subr.bf16.mxu0 0
    %779 = vmatpush2.bf16.msra.mxu0 0
    %780 = vmatprep.subr.bf16.mxu0 0
    %781 = vmatpush2.bf16.msra.mxu0 0
    %782 = vmatprep.subr.bf16.mxu0 0
    %783 = vmatpush2.bf16.msra.mxu0 0
    %784 = vmatprep.subr.bf16.mxu0 0
    %785 = vmatpush2.bf16.msra.mxu0 0
    %786 = vmatprep.subr.bf16.mxu0 0
    %787 = vmatpush2.bf16.msra.mxu0 0
    %788 = vmatprep.mubr.bf16.mxu0 0
    %789 = vmatmul.mubr.bf16.gmra.mxu0 %v748
    %v790 = vpop.f32.mrf.mxu0
    %v791 = vadd.f32 0.0, %v790
    %v792 = vpop.f32.mrf.mxu0
    %v793 = vadd.f32 0.0, %v792
    %v794 = vpop.f32.mrf.mxu0
    %v795 = vpop.f32.mrf.mxu0
    %796 = vdwg.mxu0
    %v797 = vadd.f32 %v735, %v791
    %v798 = vadd.f32 %v737, %v793
    %v799 = vld [vmem:[%s226] sm:$0xf]
    %800 = vrot.lane.b32.xlu0 %v634, 112
    %v801 = vpop.permute.xlu0 %800
    %802 = vrot.lane.b32.xlu0 %v635, 112
    %v803 = vpop.permute.xlu0 %802
    %v804 = vsel %vm232, %v801, %v803
    %v806 = vsel %vm61, %v799, 0
    %v809 = vand.u32 %v804, %v68
    %v812 = vand.u32 %v803, %v68
    %814 = vmatprep.subr.bf16.mxu0 0
    %815 = vmatpush1.bf16.msra.mxu0 0
    %816 = vmatprep.subr.bf16.mxu0 0
    %817 = vmatpush1.bf16.msra.mxu0 0
    %818 = vmatprep.subr.bf16.mxu0 0
    %819 = vmatpush1.bf16.msra.mxu0 0
    %820 = vmatprep.subr.bf16.mxu0 0
    %821 = vmatpush1.bf16.msra.mxu0 0
    %822 = vmatprep.subr.bf16.mxu0 0
    %823 = vmatpush1.bf16.msra.mxu0 0
    %824 = vmatprep.subr.bf16.mxu0 0
    %825 = vmatpush1.bf16.msra.mxu0 0
    %826 = vmatprep.subr.bf16.mxu0 0
    %827 = vmatpush1.bf16.msra.mxu0 0
    %828 = vmatprep.subr.bf16.mxu0 %v812
    %829 = vmatpush1.bf16.msra.mxu0 %v809
    %830 = vmatprep.subr.bf16.mxu0 0
    %831 = vmatpush2.bf16.msra.mxu0 0
    %832 = vmatprep.subr.bf16.mxu0 0
    %833 = vmatpush2.bf16.msra.mxu0 0
    %834 = vmatprep.subr.bf16.mxu0 0
    %835 = vmatpush2.bf16.msra.mxu0 0
    %836 = vmatprep.subr.bf16.mxu0 0
    %837 = vmatpush2.bf16.msra.mxu0 0
    %838 = vmatprep.subr.bf16.mxu0 0
    %839 = vmatpush2.bf16.msra.mxu0 0
    %840 = vmatprep.subr.bf16.mxu0 0
    %841 = vmatpush2.bf16.msra.mxu0 0
    %842 = vmatprep.subr.bf16.mxu0 0
    %843 = vmatpush2.bf16.msra.mxu0 0
    %844 = vmatprep.subr.bf16.mxu0 0
    %845 = vmatpush2.bf16.msra.mxu0 0
    %846 = vmatprep.mubr.bf16.mxu0 0
    %847 = vmatmul.mubr.bf16.gmra.mxu0 %v806
    %v848 = vpop.f32.mrf.mxu0
    %v849 = vadd.f32 0.0, %v848
    %v850 = vpop.f32.mrf.mxu0
    %v851 = vadd.f32 0.0, %v850
    %v852 = vpop.f32.mrf.mxu0
    %v853 = vpop.f32.mrf.mxu0
    %854 = vdwg.mxu0
    %v855 = vadd.f32 %v797, %v849
    %v856 = vadd.f32 %v798, %v851
    %v857 = vld [vmem:[%s286] sm:$0xf]
    %858 = vrot.lane.b32.xlu0 %v634, 111
    %v859 = vpop.permute.xlu0 %858
    %860 = vrot.lane.b32.xlu0 %v635, 111
    %v861 = vpop.permute.xlu0 %860
    %v862 = vsel %vm292, %v859, %v861
    %v864 = vsel %vm61, %v857, 0
    %v867 = vand.u32 %v862, %v68
    %v870 = vand.u32 %v861, %v68
    %872 = vmatprep.subr.bf16.mxu0 0
    %873 = vmatpush1.bf16.msra.mxu0 0
    %874 = vmatprep.subr.bf16.mxu0 0
    %875 = vmatpush1.bf16.msra.mxu0 0
    %876 = vmatprep.subr.bf16.mxu0 0
    %877 = vmatpush1.bf16.msra.mxu0 0
    %878 = vmatprep.subr.bf16.mxu0 0
    %879 = vmatpush1.bf16.msra.mxu0 0
    %880 = vmatprep.subr.bf16.mxu0 0
    %881 = vmatpush1.bf16.msra.mxu0 0
    %882 = vmatprep.subr.bf16.mxu0 0
    %883 = vmatpush1.bf16.msra.mxu0 0
    %884 = vmatprep.subr.bf16.mxu0 0
    %885 = vmatpush1.bf16.msra.mxu0 0
    %886 = vmatprep.subr.bf16.mxu0 %v870
    %887 = vmatpush1.bf16.msra.mxu0 %v867
    %888 = vmatprep.subr.bf16.mxu0 0
    %889 = vmatpush2.bf16.msra.mxu0 0
    %890 = vmatprep.subr.bf16.mxu0 0
    %891 = vmatpush2.bf16.msra.mxu0 0
    %892 = vmatprep.subr.bf16.mxu0 0
    %893 = vmatpush2.bf16.msra.mxu0 0
    %894 = vmatprep.subr.bf16.mxu0 0
    %895 = vmatpush2.bf16.msra.mxu0 0
    %896 = vmatprep.subr.bf16.mxu0 0
    %897 = vmatpush2.bf16.msra.mxu0 0
    %898 = vmatprep.subr.bf16.mxu0 0
    %899 = vmatpush2.bf16.msra.mxu0 0
    %900 = vmatprep.subr.bf16.mxu0 0
    %901 = vmatpush2.bf16.msra.mxu0 0
    %902 = vmatprep.subr.bf16.mxu0 0
    %903 = vmatpush2.bf16.msra.mxu0 0
    %904 = vmatprep.mubr.bf16.mxu0 0
    %905 = vmatmul.mubr.bf16.gmra.mxu0 %v864
    %v906 = vpop.f32.mrf.mxu0
    %v907 = vadd.f32 0.0, %v906
    %v908 = vpop.f32.mrf.mxu0
    %v909 = vadd.f32 0.0, %v908
    %v910 = vpop.f32.mrf.mxu0
    %v911 = vpop.f32.mrf.mxu0
    %912 = vdwg.mxu0
    %v913 = vadd.f32 %v855, %v907
    %v914 = vadd.f32 %v856, %v909
    %v915 = vld [vmem:[%s346] sm:$0xf]
    %916 = vrot.lane.b32.xlu0 %v634, 110
    %v917 = vpop.permute.xlu0 %916
    %918 = vrot.lane.b32.xlu0 %v635, 110
    %v919 = vpop.permute.xlu0 %918
    %v920 = vsel %vm352, %v917, %v919
    %v922 = vsel %vm61, %v915, 0
    %v925 = vand.u32 %v920, %v68
    %v928 = vand.u32 %v919, %v68
    %930 = vmatprep.subr.bf16.mxu0 0
    %931 = vmatpush1.bf16.msra.mxu0 0
    %932 = vmatprep.subr.bf16.mxu0 0
    %933 = vmatpush1.bf16.msra.mxu0 0
    %934 = vmatprep.subr.bf16.mxu0 0
    %935 = vmatpush1.bf16.msra.mxu0 0
    %936 = vmatprep.subr.bf16.mxu0 0
    %937 = vmatpush1.bf16.msra.mxu0 0
    %938 = vmatprep.subr.bf16.mxu0 0
    %939 = vmatpush1.bf16.msra.mxu0 0
    %940 = vmatprep.subr.bf16.mxu0 0
    %941 = vmatpush1.bf16.msra.mxu0 0
    %942 = vmatprep.subr.bf16.mxu0 0
    %943 = vmatpush1.bf16.msra.mxu0 0
    %944 = vmatprep.subr.bf16.mxu0 %v928
    %945 = vmatpush1.bf16.msra.mxu0 %v925
    %946 = vmatprep.subr.bf16.mxu0 0
    %947 = vmatpush2.bf16.msra.mxu0 0
    %948 = vmatprep.subr.bf16.mxu0 0
    %949 = vmatpush2.bf16.msra.mxu0 0
    %950 = vmatprep.subr.bf16.mxu0 0
    %951 = vmatpush2.bf16.msra.mxu0 0
    %952 = vmatprep.subr.bf16.mxu0 0
    %953 = vmatpush2.bf16.msra.mxu0 0
    %954 = vmatprep.subr.bf16.mxu0 0
    %955 = vmatpush2.bf16.msra.mxu0 0
    %956 = vmatprep.subr.bf16.mxu0 0
    %957 = vmatpush2.bf16.msra.mxu0 0
    %958 = vmatprep.subr.bf16.mxu0 0
    %959 = vmatpush2.bf16.msra.mxu0 0
    %960 = vmatprep.subr.bf16.mxu0 0
    %961 = vmatpush2.bf16.msra.mxu0 0
    %962 = vmatprep.mubr.bf16.mxu0 0
    %963 = vmatmul.mubr.bf16.gmra.mxu0 %v922
    %v964 = vpop.f32.mrf.mxu0
    %v965 = vadd.f32 0.0, %v964
    %v966 = vpop.f32.mrf.mxu0
    %v967 = vadd.f32 0.0, %v966
    %v968 = vpop.f32.mrf.mxu0
    %v969 = vpop.f32.mrf.mxu0
    %970 = vdwg.mxu0
    %v971 = vadd.f32 %v913, %v965
    %v972 = vadd.f32 %v914, %v967
    %v973 = vld [vmem:[%s406] sm:$0xf]
    %974 = vrot.lane.b32.xlu0 %v634, 96
    %v975 = vpop.permute.xlu0 %974
    %976 = vrot.lane.b32.xlu0 %v635, 96
    %v977 = vpop.permute.xlu0 %976
    %v978 = vsel %vm412, %v975, %v977
    %v980 = vsel %vm61, %v973, 0
    %v983 = vand.u32 %v978, %v68
    %v986 = vand.u32 %v977, %v68
    %988 = vmatprep.subr.bf16.mxu0 0
    %989 = vmatpush1.bf16.msra.mxu0 0
    %990 = vmatprep.subr.bf16.mxu0 0
    %991 = vmatpush1.bf16.msra.mxu0 0
    %992 = vmatprep.subr.bf16.mxu0 0
    %993 = vmatpush1.bf16.msra.mxu0 0
    %994 = vmatprep.subr.bf16.mxu0 0
    %995 = vmatpush1.bf16.msra.mxu0 0
    %996 = vmatprep.subr.bf16.mxu0 0
    %997 = vmatpush1.bf16.msra.mxu0 0
    %998 = vmatprep.subr.bf16.mxu0 0
    %999 = vmatpush1.bf16.msra.mxu0 0
    %1000 = vmatprep.subr.bf16.mxu0 0
    %1001 = vmatpush1.bf16.msra.mxu0 0
    %1002 = vmatprep.subr.bf16.mxu0 %v986
    %1003 = vmatpush1.bf16.msra.mxu0 %v983
    %1004 = vmatprep.subr.bf16.mxu0 0
    %1005 = vmatpush2.bf16.msra.mxu0 0
    %1006 = vmatprep.subr.bf16.mxu0 0
    %1007 = vmatpush2.bf16.msra.mxu0 0
    %1008 = vmatprep.subr.bf16.mxu0 0
    %1009 = vmatpush2.bf16.msra.mxu0 0
    %1010 = vmatprep.subr.bf16.mxu0 0
    %1011 = vmatpush2.bf16.msra.mxu0 0
    %1012 = vmatprep.subr.bf16.mxu0 0
    %1013 = vmatpush2.bf16.msra.mxu0 0
    %1014 = vmatprep.subr.bf16.mxu0 0
    %1015 = vmatpush2.bf16.msra.mxu0 0
    %1016 = vmatprep.subr.bf16.mxu0 0
    %1017 = vmatpush2.bf16.msra.mxu0 0
    %1018 = vmatprep.subr.bf16.mxu0 0
    %1019 = vmatpush2.bf16.msra.mxu0 0
    %1020 = vmatprep.mubr.bf16.mxu0 0
    %1021 = vmatmul.mubr.bf16.gmra.mxu0 %v980
    %v1022 = vpop.f32.mrf.mxu0
    %v1023 = vadd.f32 0.0, %v1022
    %v1024 = vpop.f32.mrf.mxu0
    %v1025 = vadd.f32 0.0, %v1024
    %v1026 = vpop.f32.mrf.mxu0
    %v1027 = vpop.f32.mrf.mxu0
    %1028 = vdwg.mxu0
    %v1029 = vadd.f32 %v971, %v1023
    %v1030 = vadd.f32 %v972, %v1025
    %v1031 = vld [vmem:[%s466] sm:$0xf]
    %1032 = vrot.lane.b32.xlu0 %v634, 95
    %v1033 = vpop.permute.xlu0 %1032
    %1034 = vrot.lane.b32.xlu0 %v635, 95
    %v1035 = vpop.permute.xlu0 %1034
    %v1036 = vsel %vm472, %v1033, %v1035
    %v1038 = vsel %vm61, %v1031, 0
    %v1041 = vand.u32 %v1036, %v68
    %v1044 = vand.u32 %v1035, %v68
    %1046 = vmatprep.subr.bf16.mxu0 0
    %1047 = vmatpush1.bf16.msra.mxu0 0
    %1048 = vmatprep.subr.bf16.mxu0 0
    %1049 = vmatpush1.bf16.msra.mxu0 0
    %1050 = vmatprep.subr.bf16.mxu0 0
    %1051 = vmatpush1.bf16.msra.mxu0 0
    %1052 = vmatprep.subr.bf16.mxu0 0
    %1053 = vmatpush1.bf16.msra.mxu0 0
    %1054 = vmatprep.subr.bf16.mxu0 0
    %1055 = vmatpush1.bf16.msra.mxu0 0
    %1056 = vmatprep.subr.bf16.mxu0 0
    %1057 = vmatpush1.bf16.msra.mxu0 0
    %1058 = vmatprep.subr.bf16.mxu0 0
    %1059 = vmatpush1.bf16.msra.mxu0 0
    %1060 = vmatprep.subr.bf16.mxu0 %v1044
    %1061 = vmatpush1.bf16.msra.mxu0 %v1041
    %1062 = vmatprep.subr.bf16.mxu0 0
    %1063 = vmatpush2.bf16.msra.mxu0 0
    %1064 = vmatprep.subr.bf16.mxu0 0
    %1065 = vmatpush2.bf16.msra.mxu0 0
    %1066 = vmatprep.subr.bf16.mxu0 0
    %1067 = vmatpush2.bf16.msra.mxu0 0
    %1068 = vmatprep.subr.bf16.mxu0 0
    %1069 = vmatpush2.bf16.msra.mxu0 0
    %1070 = vmatprep.subr.bf16.mxu0 0
    %1071 = vmatpush2.bf16.msra.mxu0 0
    %1072 = vmatprep.subr.bf16.mxu0 0
    %1073 = vmatpush2.bf16.msra.mxu0 0
    %1074 = vmatprep.subr.bf16.mxu0 0
    %1075 = vmatpush2.bf16.msra.mxu0 0
    %1076 = vmatprep.subr.bf16.mxu0 0
    %1077 = vmatpush2.bf16.msra.mxu0 0
    %1078 = vmatprep.mubr.bf16.mxu0 0
    %1079 = vmatmul.mubr.bf16.gmra.mxu0 %v1038
    %v1080 = vpop.f32.mrf.mxu0
    %v1081 = vadd.f32 0.0, %v1080
    %v1082 = vpop.f32.mrf.mxu0
    %v1083 = vadd.f32 0.0, %v1082
    %v1084 = vpop.f32.mrf.mxu0
    %v1085 = vpop.f32.mrf.mxu0
    %1086 = vdwg.mxu0
    %v1087 = vadd.f32 %v1029, %v1081
    %v1088 = vadd.f32 %v1030, %v1083
    %v1089 = vld [vmem:[%s526] sm:$0xf]
    %1090 = vrot.lane.b32.xlu0 %v634, 94
    %v1091 = vpop.permute.xlu0 %1090
    %1092 = vrot.lane.b32.xlu0 %v635, 94
    %v1093 = vpop.permute.xlu0 %1092
    %v1094 = vsel %vm532, %v1091, %v1093
    %v1096 = vsel %vm61, %v1089, 0
    %v1099 = vand.u32 %v1094, %v68
    %v1102 = vand.u32 %v1093, %v68
    %1104 = vmatprep.subr.bf16.mxu0 0
    %1105 = vmatpush1.bf16.msra.mxu0 0
    %1106 = vmatprep.subr.bf16.mxu0 0
    %1107 = vmatpush1.bf16.msra.mxu0 0
    %1108 = vmatprep.subr.bf16.mxu0 0
    %1109 = vmatpush1.bf16.msra.mxu0 0
    %1110 = vmatprep.subr.bf16.mxu0 0
    %1111 = vmatpush1.bf16.msra.mxu0 0
    %1112 = vmatprep.subr.bf16.mxu0 0
    %1113 = vmatpush1.bf16.msra.mxu0 0
    %1114 = vmatprep.subr.bf16.mxu0 0
    %1115 = vmatpush1.bf16.msra.mxu0 0
    %1116 = vmatprep.subr.bf16.mxu0 0
    %1117 = vmatpush1.bf16.msra.mxu0 0
    %1118 = vmatprep.subr.bf16.mxu0 %v1102
    %1119 = vmatpush1.bf16.msra.mxu0 %v1099
    %1120 = vmatprep.subr.bf16.mxu0 0
    %1121 = vmatpush2.bf16.msra.mxu0 0
    %1122 = vmatprep.subr.bf16.mxu0 0
    %1123 = vmatpush2.bf16.msra.mxu0 0
    %1124 = vmatprep.subr.bf16.mxu0 0
    %1125 = vmatpush2.bf16.msra.mxu0 0
    %1126 = vmatprep.subr.bf16.mxu0 0
    %1127 = vmatpush2.bf16.msra.mxu0 0
    %1128 = vmatprep.subr.bf16.mxu0 0
    %1129 = vmatpush2.bf16.msra.mxu0 0
    %1130 = vmatprep.subr.bf16.mxu0 0
    %1131 = vmatpush2.bf16.msra.mxu0 0
    %1132 = vmatprep.subr.bf16.mxu0 0
    %1133 = vmatpush2.bf16.msra.mxu0 0
    %1134 = vmatprep.subr.bf16.mxu0 0
    %1135 = vmatpush2.bf16.msra.mxu0 0
    %1136 = vmatprep.mubr.bf16.mxu0 0
    %1137 = vmatmul.mubr.bf16.gmra.mxu0 %v1096
    %v1138 = vpop.f32.mrf.mxu0
    %v1139 = vadd.f32 0.0, %v1138
    %v1140 = vpop.f32.mrf.mxu0
    %v1141 = vadd.f32 0.0, %v1140
    %v1142 = vpop.f32.mrf.mxu0
    %v1143 = vpop.f32.mrf.mxu0
    %1144 = vdwg.mxu0
    %v1145 = vadd.f32 %v1087, %v1139
    %v1146 = vadd.f32 %v1088, %v1141
    %v1147 = vadd.f32 %v1145, %v589
    %v1148 = vadd.f32 %v1146, %v589
    %v1149 = vmax.f32 %v1147, 0.0
    %v1150 = vmax.f32 %v1148, 0.0
    %v1151 = vmul.f32 %v1149, %v599
    %v1152 = vmul.f32 %v1150, %v603
    %v1153 = vsel %vm608, %v1152, 0.0
    %v1154 = vadd.f32 %v1151, %v1153
    %1155 = vadd.xlane.f32.xlu0 %v1154
    %v1156 = vpop.xlane.xlu0 %1155
    %v1158 = vlaneseq
    %v1159 = vshrl.u32 %v1158, 7
    %v1160 = vsub.s32 %v615, %v1159
    %v1161 = vrot.slane %v1156, %v1160
    %1163 = vst.msk [vmem:[#allocation2 + $0x1] sm:$0x1] %vm621, %v1161
    %v1164 = vld [vmem:[#allocation2] sm:$0x3]
    %v1165 = vpack.c.bf16 %v1164, %v1164
    %v1166 = vld [vmem:[%s4] sm:$0xff]
    %v1167 = vld [vmem:[%s4 + $0x8] sm:$0xff]
    %v1168 = vld [vmem:[%s5] sm:$0xf]
    %v1170 = vlaneseq
    %v1171 = vshrl.u32 %v1170, 7
    %v1172 = vsub.s32 0, %v1171
    %v1173 = vrot.slane %v1168, %v1172
    %v1174 = vlaneseq
    %v1175 = vshrl.u32 %v1174, 7
    %v1176 = vsub.s32 1, %v1175
    %v1177 = vrot.slane %v1168, %v1176
    %v1178 = vlaneseq
    %v1179 = vshrl.u32 %v1178, 7
    %v1180 = vsub.s32 2, %v1179
    %v1181 = vrot.slane %v1168, %v1180
    %v1182 = vlaneseq
    %v1183 = vshrl.u32 %v1182, 7
    %v1184 = vsub.s32 3, %v1183
    %v1185 = vrot.slane %v1168, %v1184
    %v1192 = vunpack.c.l.b16 %v1166
    %v1193 = vunpack.c.h.b16 %v1166
    %v1194 = vunpack.c.l.b16 %v1167
    %v1195 = vunpack.c.h.b16 %v1167
    %v1196 = vpack.c.b16 %v1192, %v1192
    %v1197 = vpack.c.b16 %v1193, %v1193
    %v1198 = vpack.c.b16 %v1194, %v1194
    %v1199 = vpack.c.b16 %v1195, %v1195
    %vm1200 = vcmask 64512
    %v1202 = vsel %vm1200, %v1165, 0
    %vm1204 = vcmask 1043456
    %v1206 = vsel %vm1204, %v1196, 0
    %v1209 = vsel %vm1204, %v1197, 0
    %v1212 = vsel %vm1204, %v1198, 0
    %v1215 = vsel %vm1204, %v1199, 0
    %1217 = vmatprep.subr.bf16.mxu0 0
    %1218 = vmatpush1.bf16.msra.mxu0 0
    %1219 = vmatprep.subr.bf16.mxu0 0
    %1220 = vmatpush1.bf16.msra.mxu0 0
    %1221 = vmatprep.subr.bf16.mxu0 0
    %1222 = vmatpush1.bf16.msra.mxu0 0
    %1223 = vmatprep.subr.bf16.mxu0 0
    %1224 = vmatpush1.bf16.msra.mxu0 0
    %1225 = vmatprep.subr.bf16.mxu0 0
    %1226 = vmatpush1.bf16.msra.mxu0 0
    %1227 = vmatprep.subr.bf16.mxu0 0
    %1228 = vmatpush1.bf16.msra.mxu0 0
    %1229 = vmatprep.subr.bf16.mxu0 0
    %1230 = vmatpush1.bf16.msra.mxu0 0
    %1231 = vmatprep.subr.bf16.mxu0 %v1209
    %1232 = vmatpush1.bf16.msra.mxu0 %v1206
    %1233 = vmatprep.subr.bf16.mxu0 0
    %1234 = vmatpush2.bf16.msra.mxu0 0
    %1235 = vmatprep.subr.bf16.mxu0 0
    %1236 = vmatpush2.bf16.msra.mxu0 0
    %1237 = vmatprep.subr.bf16.mxu0 0
    %1238 = vmatpush2.bf16.msra.mxu0 0
    %1239 = vmatprep.subr.bf16.mxu0 0
    %1240 = vmatpush2.bf16.msra.mxu0 0
    %1241 = vmatprep.subr.bf16.mxu0 0
    %1242 = vmatpush2.bf16.msra.mxu0 0
    %1243 = vmatprep.subr.bf16.mxu0 0
    %1244 = vmatpush2.bf16.msra.mxu0 0
    %1245 = vmatprep.subr.bf16.mxu0 0
    %1246 = vmatpush2.bf16.msra.mxu0 0
    %1247 = vmatprep.subr.bf16.mxu0 0
    %1248 = vmatpush2.bf16.msra.mxu0 0
    %1249 = vmatprep.mubr.bf16.mxu0 0
    %1250 = vmatmul.mubr.bf16.gmra.mxu0 %v1202
    %v1251 = vpop.f32.mrf.mxu0
    %v1252 = vadd.f32 %v1173, %v1251
    %v1253 = vpop.f32.mrf.mxu0
    %v1254 = vadd.f32 %v1177, %v1253
    %v1255 = vpop.f32.mrf.mxu0
    %v1256 = vpop.f32.mrf.mxu0
    %1257 = vdwg.mxu0
    %1258 = vmatprep.subr.bf16.mxu0 0
    %1259 = vmatpush1.bf16.msra.mxu0 0
    %1260 = vmatprep.subr.bf16.mxu0 0
    %1261 = vmatpush1.bf16.msra.mxu0 0
    %1262 = vmatprep.subr.bf16.mxu0 0
    %1263 = vmatpush1.bf16.msra.mxu0 0
    %1264 = vmatprep.subr.bf16.mxu0 0
    %1265 = vmatpush1.bf16.msra.mxu0 0
    %1266 = vmatprep.subr.bf16.mxu0 0
    %1267 = vmatpush1.bf16.msra.mxu0 0
    %1268 = vmatprep.subr.bf16.mxu0 0
    %1269 = vmatpush1.bf16.msra.mxu0 0
    %1270 = vmatprep.subr.bf16.mxu0 0
    %1271 = vmatpush1.bf16.msra.mxu0 0
    %1272 = vmatprep.subr.bf16.mxu0 %v1215
    %1273 = vmatpush1.bf16.msra.mxu0 %v1212
    %1274 = vmatprep.subr.bf16.mxu0 0
    %1275 = vmatpush2.bf16.msra.mxu0 0
    %1276 = vmatprep.subr.bf16.mxu0 0
    %1277 = vmatpush2.bf16.msra.mxu0 0
    %1278 = vmatprep.subr.bf16.mxu0 0
    %1279 = vmatpush2.bf16.msra.mxu0 0
    %1280 = vmatprep.subr.bf16.mxu0 0
    %1281 = vmatpush2.bf16.msra.mxu0 0
    %1282 = vmatprep.subr.bf16.mxu0 0
    %1283 = vmatpush2.bf16.msra.mxu0 0
    %1284 = vmatprep.subr.bf16.mxu0 0
    %1285 = vmatpush2.bf16.msra.mxu0 0
    %1286 = vmatprep.subr.bf16.mxu0 0
    %1287 = vmatpush2.bf16.msra.mxu0 0
    %1288 = vmatprep.subr.bf16.mxu0 0
    %1289 = vmatpush2.bf16.msra.mxu0 0
    %1290 = vmatprep.mubr.bf16.mxu0 0
    %1291 = vmatmul.mubr.bf16.gmra.mxu0 %v1202
    %v1292 = vpop.f32.mrf.mxu0
    %v1293 = vadd.f32 %v1181, %v1292
    %v1294 = vpop.f32.mrf.mxu0
    %v1295 = vadd.f32 %v1185, %v1294
    %v1296 = vpop.f32.mrf.mxu0
    %v1297 = vpop.f32.mrf.mxu0
    %1298 = vdwg.mxu0
    %v1299 = vmul.f32 %v1252, %v1252
    %v1300 = vmul.f32 %v1254, %v1254
    %v1301 = vmul.f32 %v1293, %v1293
    %v1302 = vmul.f32 %v1295, %v1295
    %v1303 = vsel %vm66, %v1299, 0.0
    %v1304 = vsel %vm66, %v1300, 0.0
    %v1305 = vadd.f32 %v1303, %v1304
    %v1306 = vsel %vm66, %v1301, 0.0
    %v1307 = vadd.f32 %v1305, %v1306
    %v1308 = vsel %vm66, %v1302, 0.0
    %v1309 = vadd.f32 %v1307, %v1308
    %1310 = vadd.xlane.f32.xlu0 %v1309
    %v1311 = vpop.xlane.xlu0 %1310
    %v1312 = vmax.f32 %v1311, 1e-24
    %v1313 = vrsqrt.pop %v1312
    %v1314 = vmul.f32 %v1252, %v1313
    %v1315 = vmul.f32 %v1254, %v1313
    %v1316 = vmul.f32 %v1293, %v1313
    %v1317 = vmul.f32 %v1295, %v1313
    %v1322 = vcombine.low %v1314, %v1315
    %v1323 = vcombine.low %v1316, %v1317
    %v1325 = vunpack.c.l.s4 1983009808
    %v1326 = vunpack.c.0.s8 %v1325
    %v1327 = vlaneseq
    %v1328 = vshrl.u32 %v1327, 7
    %v1329 = vsub.s32 %v1326, %v1328
    %v1330 = vrot.slane %v1322, %v1329
    %v1332 = vunpack.c.l.s4 1983009808
    %v1333 = vunpack.c.0.s8 %v1332
    %v1334 = vlaneseq
    %v1335 = vshrl.u32 %v1334, 7
    %v1336 = vsub.s32 %v1333, %v1335
    %v1337 = vrot.slane %v1323, %v1336
    %v1338 = vcombine.low %v1330, %v1337
    %1340 = vst [vmem:[#allocation3] sm:$0xff] %v1338
    %v1341 = vpack.c.bf16 %v1314, %v1314
    %v1342 = vpack.c.bf16 %v1315, %v1315
    %v1343 = vpack.c.bf16 %v1316, %v1316
    %v1344 = vpack.c.bf16 %v1317, %v1317
    %v1345 = vld [vmem:[%s6] sm:$0xff]
    %v1346 = vld [vmem:[%s6 + $0x8] sm:$0xff]
    %v1347 = vld [vmem:[%s6 + $0x10] sm:$0xff]
    %v1348 = vld [vmem:[%s6 + $0x18] sm:$0xff]
    %v1349 = vld [vmem:[%s6 + $0x20] sm:$0xff]
    %v1350 = vld [vmem:[%s6 + $0x28] sm:$0xff]
    %v1351 = vld [vmem:[%s6 + $0x30] sm:$0xff]
    %v1352 = vld [vmem:[%s6 + $0x38] sm:$0xff]
    %v1353 = vld [vmem:[%s6 + $0x40] sm:$0xff]
    %v1354 = vld [vmem:[%s6 + $0x48] sm:$0xff]
    %v1355 = vld [vmem:[%s6 + $0x50] sm:$0xff]
    %v1356 = vld [vmem:[%s6 + $0x58] sm:$0xff]
    %v1357 = vld [vmem:[%s6 + $0x60] sm:$0xff]
    %v1358 = vld [vmem:[%s6 + $0x68] sm:$0xff]
    %v1359 = vld [vmem:[%s6 + $0x70] sm:$0xff]
    %v1360 = vld [vmem:[%s6 + $0x78] sm:$0xff]
    %v1361 = vld [vmem:[%s6 + $0x80] sm:$0xff]
    %v1362 = vld [vmem:[%s6 + $0x88] sm:$0xff]
    %v1363 = vld [vmem:[%s6 + $0x90] sm:$0xff]
    %v1364 = vld [vmem:[%s6 + $0x98] sm:$0xff]
    %v1365 = vld [vmem:[%s6 + $0xa0] sm:$0xff]
    %v1366 = vld [vmem:[%s6 + $0xa8] sm:$0xff]
    %v1367 = vld [vmem:[%s6 + $0xb0] sm:$0xff]
    %v1368 = vld [vmem:[%s6 + $0xb8] sm:$0xff]
    %v1369 = vld [vmem:[%s6 + $0xc0] sm:$0xff]
    %v1370 = vld [vmem:[%s6 + $0xc8] sm:$0xff]
    %v1371 = vld [vmem:[%s6 + $0xd0] sm:$0xff]
    %v1372 = vld [vmem:[%s6 + $0xd8] sm:$0xff]
    %v1373 = vld [vmem:[%s6 + $0xe0] sm:$0xff]
    %v1374 = vld [vmem:[%s6 + $0xe8] sm:$0xff]
    %v1375 = vld [vmem:[%s6 + $0xf0] sm:$0xff]
    %v1376 = vld [vmem:[%s6 + $0xf8] sm:$0xff]
    %v1377 = vld [vmem:[%s6 + $0x100] sm:$0xff]
    %v1378 = vld [vmem:[%s6 + $0x108] sm:$0xff]
    %v1379 = vld [vmem:[%s6 + $0x110] sm:$0xff]
    %v1380 = vld [vmem:[%s6 + $0x118] sm:$0xff]
    %v1381 = vld [vmem:[%s6 + $0x120] sm:$0xff]
    %v1382 = vld [vmem:[%s6 + $0x128] sm:$0xff]
    %v1383 = vld [vmem:[%s6 + $0x130] sm:$0xff]
    %v1384 = vld [vmem:[%s6 + $0x138] sm:$0xff]
    %v1385 = vld [vmem:[%s6 + $0x140] sm:$0xff]
    %v1386 = vld [vmem:[%s6 + $0x148] sm:$0xff]
    %v1387 = vld [vmem:[%s6 + $0x150] sm:$0xff]
    %v1388 = vld [vmem:[%s6 + $0x158] sm:$0xff]
    %v1389 = vld [vmem:[%s6 + $0x160] sm:$0xff]
    %v1390 = vld [vmem:[%s6 + $0x168] sm:$0xff]
    %v1391 = vld [vmem:[%s6 + $0x170] sm:$0xff]
    %v1392 = vld [vmem:[%s6 + $0x178] sm:$0xff]
    %v1393 = vld [vmem:[%s6 + $0x180] sm:$0xff]
    %v1394 = vld [vmem:[%s6 + $0x188] sm:$0xff]
    %v1395 = vld [vmem:[%s6 + $0x190] sm:$0xff]
    %v1396 = vld [vmem:[%s6 + $0x198] sm:$0xff]
    %v1397 = vld [vmem:[%s6 + $0x1a0] sm:$0xff]
    %v1398 = vld [vmem:[%s6 + $0x1a8] sm:$0xff]
    %v1399 = vld [vmem:[%s6 + $0x1b0] sm:$0xff]
    %v1400 = vld [vmem:[%s6 + $0x1b8] sm:$0xff]
    %v1401 = vld [vmem:[%s6 + $0x1c0] sm:$0xff]
    %v1402 = vld [vmem:[%s6 + $0x1c8] sm:$0xff]
    %v1403 = vld [vmem:[%s6 + $0x1d0] sm:$0xff]
    %v1404 = vld [vmem:[%s6 + $0x1d8] sm:$0xff]
    %v1405 = vld [vmem:[%s6 + $0x1e0] sm:$0xff]
    %v1406 = vld [vmem:[%s6 + $0x1e8] sm:$0xff]
    %v1407 = vld [vmem:[%s6 + $0x1f0] sm:$0xff]
    %v1408 = vld [vmem:[%s6 + $0x1f8] sm:$0xff]
    %v1409 = vld [vmem:[%s7] sm:$0x3]
    %v1411 = vlaneseq
    %v1412 = vshrl.u32 %v1411, 7
    %v1413 = vsub.s32 0, %v1412
    %v1414 = vrot.slane %v1409, %v1413
    %v1415 = vlaneseq
    %v1416 = vshrl.u32 %v1415, 7
    %v1417 = vsub.s32 1, %v1416
    %v1418 = vrot.slane %v1409, %v1417
    %v1485 = vunpack.c.l.b16 %v1345
    %v1486 = vunpack.c.h.b16 %v1345
    %v1487 = vunpack.c.l.b16 %v1346
    %v1488 = vunpack.c.h.b16 %v1346
    %v1489 = vunpack.c.l.b16 %v1347
    %v1490 = vunpack.c.h.b16 %v1347
    %v1491 = vunpack.c.l.b16 %v1348
    %v1492 = vunpack.c.h.b16 %v1348
    %v1493 = vunpack.c.l.b16 %v1349
    %v1494 = vunpack.c.h.b16 %v1349
    %v1495 = vunpack.c.l.b16 %v1350
    %v1496 = vunpack.c.h.b16 %v1350
    %v1497 = vunpack.c.l.b16 %v1351
    %v1498 = vunpack.c.h.b16 %v1351
    %v1499 = vunpack.c.l.b16 %v1352
    %v1500 = vunpack.c.h.b16 %v1352
    %v1501 = vunpack.c.l.b16 %v1353
    %v1502 = vunpack.c.h.b16 %v1353
    %v1503 = vunpack.c.l.b16 %v1354
    %v1504 = vunpack.c.h.b16 %v1354
    %v1505 = vunpack.c.l.b16 %v1355
    %v1506 = vunpack.c.h.b16 %v1355
    %v1507 = vunpack.c.l.b16 %v1356
    %v1508 = vunpack.c.h.b16 %v1356
    %v1509 = vunpack.c.l.b16 %v1357
    %v1510 = vunpack.c.h.b16 %v1357
    %v1511 = vunpack.c.l.b16 %v1358
    %v1512 = vunpack.c.h.b16 %v1358
    %v1513 = vunpack.c.l.b16 %v1359
    %v1514 = vunpack.c.h.b16 %v1359
    %v1515 = vunpack.c.l.b16 %v1360
    %v1516 = vunpack.c.h.b16 %v1360
    %v1517 = vunpack.c.l.b16 %v1361
    %v1518 = vunpack.c.h.b16 %v1361
    %v1519 = vunpack.c.l.b16 %v1362
    %v1520 = vunpack.c.h.b16 %v1362
    %v1521 = vunpack.c.l.b16 %v1363
    %v1522 = vunpack.c.h.b16 %v1363
    %v1523 = vunpack.c.l.b16 %v1364
    %v1524 = vunpack.c.h.b16 %v1364
    %v1525 = vunpack.c.l.b16 %v1365
    %v1526 = vunpack.c.h.b16 %v1365
    %v1527 = vunpack.c.l.b16 %v1366
    %v1528 = vunpack.c.h.b16 %v1366
    %v1529 = vunpack.c.l.b16 %v1367
    %v1530 = vunpack.c.h.b16 %v1367
    %v1531 = vunpack.c.l.b16 %v1368
    %v1532 = vunpack.c.h.b16 %v1368
    %v1533 = vunpack.c.l.b16 %v1369
    %v1534 = vunpack.c.h.b16 %v1369
    %v1535 = vunpack.c.l.b16 %v1370
    %v1536 = vunpack.c.h.b16 %v1370
    %v1537 = vunpack.c.l.b16 %v1371
    %v1538 = vunpack.c.h.b16 %v1371
    %v1539 = vunpack.c.l.b16 %v1372
    %v1540 = vunpack.c.h.b16 %v1372
    %v1541 = vunpack.c.l.b16 %v1373
    %v1542 = vunpack.c.h.b16 %v1373
    %v1543 = vunpack.c.l.b16 %v1374
    %v1544 = vunpack.c.h.b16 %v1374
    %v1545 = vunpack.c.l.b16 %v1375
    %v1546 = vunpack.c.h.b16 %v1375
    %v1547 = vunpack.c.l.b16 %v1376
    %v1548 = vunpack.c.h.b16 %v1376
    %v1549 = vunpack.c.l.b16 %v1377
    %v1550 = vunpack.c.h.b16 %v1377
    %v1551 = vunpack.c.l.b16 %v1378
    %v1552 = vunpack.c.h.b16 %v1378
    %v1553 = vunpack.c.l.b16 %v1379
    %v1554 = vunpack.c.h.b16 %v1379
    %v1555 = vunpack.c.l.b16 %v1380
    %v1556 = vunpack.c.h.b16 %v1380
    %v1557 = vunpack.c.l.b16 %v1381
    %v1558 = vunpack.c.h.b16 %v1381
    %v1559 = vunpack.c.l.b16 %v1382
    %v1560 = vunpack.c.h.b16 %v1382
    %v1561 = vunpack.c.l.b16 %v1383
    %v1562 = vunpack.c.h.b16 %v1383
    %v1563 = vunpack.c.l.b16 %v1384
    %v1564 = vunpack.c.h.b16 %v1384
    %v1565 = vunpack.c.l.b16 %v1385
    %v1566 = vunpack.c.h.b16 %v1385
    %v1567 = vunpack.c.l.b16 %v1386
    %v1568 = vunpack.c.h.b16 %v1386
    %v1569 = vunpack.c.l.b16 %v1387
    %v1570 = vunpack.c.h.b16 %v1387
    %v1571 = vunpack.c.l.b16 %v1388
    %v1572 = vunpack.c.h.b16 %v1388
    %v1573 = vunpack.c.l.b16 %v1389
    %v1574 = vunpack.c.h.b16 %v1389
    %v1575 = vunpack.c.l.b16 %v1390
    %v1576 = vunpack.c.h.b16 %v1390
    %v1577 = vunpack.c.l.b16 %v1391
    %v1578 = vunpack.c.h.b16 %v1391
    %v1579 = vunpack.c.l.b16 %v1392
    %v1580 = vunpack.c.h.b16 %v1392
    %v1581 = vunpack.c.l.b16 %v1393
    %v1582 = vunpack.c.h.b16 %v1393
    %v1583 = vunpack.c.l.b16 %v1394
    %v1584 = vunpack.c.h.b16 %v1394
    %v1585 = vunpack.c.l.b16 %v1395
    %v1586 = vunpack.c.h.b16 %v1395
    %v1587 = vunpack.c.l.b16 %v1396
    %v1588 = vunpack.c.h.b16 %v1396
    %v1589 = vunpack.c.l.b16 %v1397
    %v1590 = vunpack.c.h.b16 %v1397
    %v1591 = vunpack.c.l.b16 %v1398
    %v1592 = vunpack.c.h.b16 %v1398
    %v1593 = vunpack.c.l.b16 %v1399
    %v1594 = vunpack.c.h.b16 %v1399
    %v1595 = vunpack.c.l.b16 %v1400
    %v1596 = vunpack.c.h.b16 %v1400
    %v1597 = vunpack.c.l.b16 %v1401
    %v1598 = vunpack.c.h.b16 %v1401
    %v1599 = vunpack.c.l.b16 %v1402
    %v1600 = vunpack.c.h.b16 %v1402
    %v1601 = vunpack.c.l.b16 %v1403
    %v1602 = vunpack.c.h.b16 %v1403
    %v1603 = vunpack.c.l.b16 %v1404
    %v1604 = vunpack.c.h.b16 %v1404
    %v1605 = vunpack.c.l.b16 %v1405
    %v1606 = vunpack.c.h.b16 %v1405
    %v1607 = vunpack.c.l.b16 %v1406
    %v1608 = vunpack.c.h.b16 %v1406
    %v1609 = vunpack.c.l.b16 %v1407
    %v1610 = vunpack.c.h.b16 %v1407
    %v1611 = vunpack.c.l.b16 %v1408
    %v1612 = vunpack.c.h.b16 %v1408
    %v1613 = vpack.c.b16 %v1487, %v1485
    %v1614 = vpack.c.b16 %v1488, %v1486
    %v1615 = vpack.c.b16 %v1491, %v1489
    %v1616 = vpack.c.b16 %v1492, %v1490
    %v1617 = vpack.c.b16 %v1495, %v1493
    %v1618 = vpack.c.b16 %v1496, %v1494
    %v1619 = vpack.c.b16 %v1499, %v1497
    %v1620 = vpack.c.b16 %v1500, %v1498
    %v1621 = vpack.c.b16 %v1503, %v1501
    %v1622 = vpack.c.b16 %v1504, %v1502
    %v1623 = vpack.c.b16 %v1507, %v1505
    %v1624 = vpack.c.b16 %v1508, %v1506
    %v1625 = vpack.c.b16 %v1511, %v1509
    %v1626 = vpack.c.b16 %v1512, %v1510
    %v1627 = vpack.c.b16 %v1515, %v1513
    %v1628 = vpack.c.b16 %v1516, %v1514
    %v1629 = vpack.c.b16 %v1519, %v1517
    %v1630 = vpack.c.b16 %v1520, %v1518
    %v1631 = vpack.c.b16 %v1523, %v1521
    %v1632 = vpack.c.b16 %v1524, %v1522
    %v1633 = vpack.c.b16 %v1527, %v1525
    %v1634 = vpack.c.b16 %v1528, %v1526
    %v1635 = vpack.c.b16 %v1531, %v1529
    %v1636 = vpack.c.b16 %v1532, %v1530
    %v1637 = vpack.c.b16 %v1535, %v1533
    %v1638 = vpack.c.b16 %v1536, %v1534
    %v1639 = vpack.c.b16 %v1539, %v1537
    %v1640 = vpack.c.b16 %v1540, %v1538
    %v1641 = vpack.c.b16 %v1543, %v1541
    %v1642 = vpack.c.b16 %v1544, %v1542
    %v1643 = vpack.c.b16 %v1547, %v1545
    %v1644 = vpack.c.b16 %v1548, %v1546
    %v1645 = vpack.c.b16 %v1551, %v1549
    %v1646 = vpack.c.b16 %v1552, %v1550
    %v1647 = vpack.c.b16 %v1555, %v1553
    %v1648 = vpack.c.b16 %v1556, %v1554
    %v1649 = vpack.c.b16 %v1559, %v1557
    %v1650 = vpack.c.b16 %v1560, %v1558
    %v1651 = vpack.c.b16 %v1563, %v1561
    %v1652 = vpack.c.b16 %v1564, %v1562
    %v1653 = vpack.c.b16 %v1567, %v1565
    %v1654 = vpack.c.b16 %v1568, %v1566
    %v1655 = vpack.c.b16 %v1571, %v1569
    %v1656 = vpack.c.b16 %v1572, %v1570
    %v1657 = vpack.c.b16 %v1575, %v1573
    %v1658 = vpack.c.b16 %v1576, %v1574
    %v1659 = vpack.c.b16 %v1579, %v1577
    %v1660 = vpack.c.b16 %v1580, %v1578
    %v1661 = vpack.c.b16 %v1583, %v1581
    %v1662 = vpack.c.b16 %v1584, %v1582
    %v1663 = vpack.c.b16 %v1587, %v1585
    %v1664 = vpack.c.b16 %v1588, %v1586
    %v1665 = vpack.c.b16 %v1591, %v1589
    %v1666 = vpack.c.b16 %v1592, %v1590
    %v1667 = vpack.c.b16 %v1595, %v1593
    %v1668 = vpack.c.b16 %v1596, %v1594
    %v1669 = vpack.c.b16 %v1599, %v1597
    %v1670 = vpack.c.b16 %v1600, %v1598
    %v1671 = vpack.c.b16 %v1603, %v1601
    %v1672 = vpack.c.b16 %v1604, %v1602
    %v1673 = vpack.c.b16 %v1607, %v1605
    %v1674 = vpack.c.b16 %v1608, %v1606
    %v1675 = vpack.c.b16 %v1611, %v1609
    %v1676 = vpack.c.b16 %v1612, %v1610
    %1741 = vmatprep.subr.bf16.mxu0 %v1628
    %1742 = vmatpush1.bf16.msra.mxu0 %v1627
    %1743 = vmatprep.subr.bf16.mxu0 %v1626
    %1744 = vmatpush1.bf16.msra.mxu0 %v1625
    %1745 = vmatprep.subr.bf16.mxu0 %v1624
    %1746 = vmatpush1.bf16.msra.mxu0 %v1623
    %1747 = vmatprep.subr.bf16.mxu0 %v1622
    %1748 = vmatpush1.bf16.msra.mxu0 %v1621
    %1749 = vmatprep.subr.bf16.mxu0 %v1620
    %1750 = vmatpush1.bf16.msra.mxu0 %v1619
    %1751 = vmatprep.subr.bf16.mxu0 %v1618
    %1752 = vmatpush1.bf16.msra.mxu0 %v1617
    %1753 = vmatprep.subr.bf16.mxu0 %v1616
    %1754 = vmatpush1.bf16.msra.mxu0 %v1615
    %1755 = vmatprep.subr.bf16.mxu0 %v1614
    %1756 = vmatpush1.bf16.msra.mxu0 %v1613
    %1757 = vmatprep.subr.bf16.mxu0 %v1644
    %1758 = vmatpush2.bf16.msra.mxu0 %v1643
    %1759 = vmatprep.subr.bf16.mxu0 %v1642
    %1760 = vmatpush2.bf16.msra.mxu0 %v1641
    %1761 = vmatprep.subr.bf16.mxu0 %v1640
    %1762 = vmatpush2.bf16.msra.mxu0 %v1639
    %1763 = vmatprep.subr.bf16.mxu0 %v1638
    %1764 = vmatpush2.bf16.msra.mxu0 %v1637
    %1765 = vmatprep.subr.bf16.mxu0 %v1636
    %1766 = vmatpush2.bf16.msra.mxu0 %v1635
    %1767 = vmatprep.subr.bf16.mxu0 %v1634
    %1768 = vmatpush2.bf16.msra.mxu0 %v1633
    %1769 = vmatprep.subr.bf16.mxu0 %v1632
    %1770 = vmatpush2.bf16.msra.mxu0 %v1631
    %1771 = vmatprep.subr.bf16.mxu0 %v1630
    %1772 = vmatpush2.bf16.msra.mxu0 %v1629
    %1773 = vmatprep.mubr.bf16.mxu0 %v1342
    %1774 = vmatmul.mubr.bf16.gmra.mxu0 %v1341
    %v1775 = vpop.f32.mrf.mxu0
    %v1776 = vadd.f32 %v1414, %v1775
    %v1777 = vpop.f32.mrf.mxu0
    %v1778 = vadd.f32 %v1418, %v1777
    %v1779 = vpop.f32.mrf.mxu0
    %v1780 = vpop.f32.mrf.mxu0
    %1781 = vdwg.mxu0
    %1782 = vmatprep.subr.bf16.mxu0 %v1660
    %1783 = vmatpush1.bf16.msra.mxu0 %v1659
    %1784 = vmatprep.subr.bf16.mxu0 %v1658
    %1785 = vmatpush1.bf16.msra.mxu0 %v1657
    %1786 = vmatprep.subr.bf16.mxu0 %v1656
    %1787 = vmatpush1.bf16.msra.mxu0 %v1655
    %1788 = vmatprep.subr.bf16.mxu0 %v1654
    %1789 = vmatpush1.bf16.msra.mxu0 %v1653
    %1790 = vmatprep.subr.bf16.mxu0 %v1652
    %1791 = vmatpush1.bf16.msra.mxu0 %v1651
    %1792 = vmatprep.subr.bf16.mxu0 %v1650
    %1793 = vmatpush1.bf16.msra.mxu0 %v1649
    %1794 = vmatprep.subr.bf16.mxu0 %v1648
    %1795 = vmatpush1.bf16.msra.mxu0 %v1647
    %1796 = vmatprep.subr.bf16.mxu0 %v1646
    %1797 = vmatpush1.bf16.msra.mxu0 %v1645
    %1798 = vmatprep.subr.bf16.mxu0 %v1676
    %1799 = vmatpush2.bf16.msra.mxu0 %v1675
    %1800 = vmatprep.subr.bf16.mxu0 %v1674
    %1801 = vmatpush2.bf16.msra.mxu0 %v1673
    %1802 = vmatprep.subr.bf16.mxu0 %v1672
    %1803 = vmatpush2.bf16.msra.mxu0 %v1671
    %1804 = vmatprep.subr.bf16.mxu0 %v1670
    %1805 = vmatpush2.bf16.msra.mxu0 %v1669
    %1806 = vmatprep.subr.bf16.mxu0 %v1668
    %1807 = vmatpush2.bf16.msra.mxu0 %v1667
    %1808 = vmatprep.subr.bf16.mxu0 %v1666
    %1809 = vmatpush2.bf16.msra.mxu0 %v1665
    %1810 = vmatprep.subr.bf16.mxu0 %v1664
    %1811 = vmatpush2.bf16.msra.mxu0 %v1663
    %1812 = vmatprep.subr.bf16.mxu0 %v1662
    %1813 = vmatpush2.bf16.msra.mxu0 %v1661
    %1814 = vmatprep.mubr.bf16.mxu0 %v1344
    %1815 = vmatmul.mubr.bf16.gmra.mxu0 %v1343
    %v1816 = vpop.f32.mrf.mxu0
    %v1817 = vadd.f32 %v1776, %v1816
    %v1818 = vpop.f32.mrf.mxu0
    %v1819 = vadd.f32 %v1778, %v1818
    %v1820 = vpop.f32.mrf.mxu0
    %v1821 = vpop.f32.mrf.mxu0
    %1822 = vdwg.mxu0
    %v1823 = vmax.f32 %v1817, 0.0
    %v1824 = vmax.f32 %v1819, 0.0
    %v1825 = vpack.c.bf16 %v1823, %v1823
    %v1826 = vpack.c.bf16 %v1824, %v1824
    %v1827 = vld [vmem:[%s8] sm:$0xf]
    %v1828 = vld [vmem:[%s8 + $0x4] sm:$0xf]
    %v1829 = vld [vmem:[%s8 + $0x8] sm:$0xf]
    %v1830 = vld [vmem:[%s8 + $0xc] sm:$0xf]
    %v1831 = vld [vmem:[%s8 + $0x10] sm:$0xf]
    %v1832 = vld [vmem:[%s8 + $0x14] sm:$0xf]
    %v1833 = vld [vmem:[%s8 + $0x18] sm:$0xf]
    %v1834 = vld [vmem:[%s8 + $0x1c] sm:$0xf]
    %v1835 = vld [vmem:[%s8 + $0x20] sm:$0xf]
    %v1836 = vld [vmem:[%s8 + $0x24] sm:$0xf]
    %v1837 = vld [vmem:[%s8 + $0x28] sm:$0xf]
    %v1838 = vld [vmem:[%s8 + $0x2c] sm:$0xf]
    %v1839 = vld [vmem:[%s8 + $0x30] sm:$0xf]
    %v1840 = vld [vmem:[%s8 + $0x34] sm:$0xf]
    %v1841 = vld [vmem:[%s8 + $0x38] sm:$0xf]
    %v1842 = vld [vmem:[%s8 + $0x3c] sm:$0xf]
    %v1843 = vld [vmem:[%s8 + $0x40] sm:$0xf]
    %v1844 = vld [vmem:[%s8 + $0x44] sm:$0xf]
    %v1845 = vld [vmem:[%s8 + $0x48] sm:$0xf]
    %v1846 = vld [vmem:[%s8 + $0x4c] sm:$0xf]
    %v1847 = vld [vmem:[%s8 + $0x50] sm:$0xf]
    %v1848 = vld [vmem:[%s8 + $0x54] sm:$0xf]
    %v1849 = vld [vmem:[%s8 + $0x58] sm:$0xf]
    %v1850 = vld [vmem:[%s8 + $0x5c] sm:$0xf]
    %v1851 = vld [vmem:[%s8 + $0x60] sm:$0xf]
    %v1852 = vld [vmem:[%s8 + $0x64] sm:$0xf]
    %v1853 = vld [vmem:[%s8 + $0x68] sm:$0xf]
    %v1854 = vld [vmem:[%s8 + $0x6c] sm:$0xf]
    %v1855 = vld [vmem:[%s8 + $0x70] sm:$0xf]
    %v1856 = vld [vmem:[%s8 + $0x74] sm:$0xf]
    %v1857 = vld [vmem:[%s8 + $0x78] sm:$0xf]
    %v1858 = vld [vmem:[%s8 + $0x7c] sm:$0xf]
    %v1859 = vld [vmem:[%s9] sm:$0x1]
    %v1861 = vlaneseq
    %v1862 = vshrl.u32 %v1861, 7
    %v1863 = vsub.s32 0, %v1862
    %v1864 = vrot.slane %v1859, %v1863
    %v1898 = vunpack.c.l.b16 %v1827
    %v1899 = vunpack.c.l.b16 %v1828
    %v1900 = vunpack.c.l.b16 %v1829
    %v1901 = vunpack.c.l.b16 %v1830
    %v1902 = vunpack.c.l.b16 %v1831
    %v1903 = vunpack.c.l.b16 %v1832
    %v1904 = vunpack.c.l.b16 %v1833
    %v1905 = vunpack.c.l.b16 %v1834
    %v1906 = vunpack.c.l.b16 %v1835
    %v1907 = vunpack.c.l.b16 %v1836
    %v1908 = vunpack.c.l.b16 %v1837
    %v1909 = vunpack.c.l.b16 %v1838
    %v1910 = vunpack.c.l.b16 %v1839
    %v1911 = vunpack.c.l.b16 %v1840
    %v1912 = vunpack.c.l.b16 %v1841
    %v1913 = vunpack.c.l.b16 %v1842
    %v1914 = vunpack.c.l.b16 %v1843
    %v1915 = vunpack.c.l.b16 %v1844
    %v1916 = vunpack.c.l.b16 %v1845
    %v1917 = vunpack.c.l.b16 %v1846
    %v1918 = vunpack.c.l.b16 %v1847
    %v1919 = vunpack.c.l.b16 %v1848
    %v1920 = vunpack.c.l.b16 %v1849
    %v1921 = vunpack.c.l.b16 %v1850
    %v1922 = vunpack.c.l.b16 %v1851
    %v1923 = vunpack.c.l.b16 %v1852
    %v1924 = vunpack.c.l.b16 %v1853
    %v1925 = vunpack.c.l.b16 %v1854
    %v1926 = vunpack.c.l.b16 %v1855
    %v1927 = vunpack.c.l.b16 %v1856
    %v1928 = vunpack.c.l.b16 %v1857
    %v1929 = vunpack.c.l.b16 %v1858
    %v1930 = vpack.c.b16 %v1899, %v1898
    %v1931 = vpack.c.b16 %v1901, %v1900
    %v1932 = vpack.c.b16 %v1903, %v1902
    %v1933 = vpack.c.b16 %v1905, %v1904
    %v1934 = vpack.c.b16 %v1907, %v1906
    %v1935 = vpack.c.b16 %v1909, %v1908
    %v1936 = vpack.c.b16 %v1911, %v1910
    %v1937 = vpack.c.b16 %v1913, %v1912
    %v1938 = vpack.c.b16 %v1915, %v1914
    %v1939 = vpack.c.b16 %v1917, %v1916
    %v1940 = vpack.c.b16 %v1919, %v1918
    %v1941 = vpack.c.b16 %v1921, %v1920
    %v1942 = vpack.c.b16 %v1923, %v1922
    %v1943 = vpack.c.b16 %v1925, %v1924
    %v1944 = vpack.c.b16 %v1927, %v1926
    %v1945 = vpack.c.b16 %v1929, %v1928
    %1962 = vmatprep.subr.bf16.mxu0 0
    %1963 = vmatpush1.bf16.msra.mxu0 %v1937
    %1964 = vmatprep.subr.bf16.mxu0 0
    %1965 = vmatpush1.bf16.msra.mxu0 %v1936
    %1966 = vmatprep.subr.bf16.mxu0 0
    %1967 = vmatpush1.bf16.msra.mxu0 %v1935
    %1968 = vmatprep.subr.bf16.mxu0 0
    %1969 = vmatpush1.bf16.msra.mxu0 %v1934
    %1970 = vmatprep.subr.bf16.mxu0 0
    %1971 = vmatpush1.bf16.msra.mxu0 %v1933
    %1972 = vmatprep.subr.bf16.mxu0 0
    %1973 = vmatpush1.bf16.msra.mxu0 %v1932
    %1974 = vmatprep.subr.bf16.mxu0 0
    %1975 = vmatpush1.bf16.msra.mxu0 %v1931
    %1976 = vmatprep.subr.bf16.mxu0 0
    %1977 = vmatpush1.bf16.msra.mxu0 %v1930
    %1978 = vmatprep.subr.bf16.mxu0 0
    %1979 = vmatpush2.bf16.msra.mxu0 %v1945
    %1980 = vmatprep.subr.bf16.mxu0 0
    %1981 = vmatpush2.bf16.msra.mxu0 %v1944
    %1982 = vmatprep.subr.bf16.mxu0 0
    %1983 = vmatpush2.bf16.msra.mxu0 %v1943
    %1984 = vmatprep.subr.bf16.mxu0 0
    %1985 = vmatpush2.bf16.msra.mxu0 %v1942
    %1986 = vmatprep.subr.bf16.mxu0 0
    %1987 = vmatpush2.bf16.msra.mxu0 %v1941
    %1988 = vmatprep.subr.bf16.mxu0 0
    %1989 = vmatpush2.bf16.msra.mxu0 %v1940
    %1990 = vmatprep.subr.bf16.mxu0 0
    %1991 = vmatpush2.bf16.msra.mxu0 %v1939
    %1992 = vmatprep.subr.bf16.mxu0 0
    %1993 = vmatpush2.bf16.msra.mxu0 %v1938
    %1994 = vmatprep.mubr.bf16.mxu0 %v1826
    %1995 = vmatmul.mubr.bf16.gmra.mxu0 %v1825
    %v1996 = vpop.f32.mrf.mxu0
    %v1997 = vadd.f32 %v1864, %v1996
    %v1998 = vpop.f32.mrf.mxu0
    %v1999 = vpop.f32.mrf.mxu0
    %v2000 = vpop.f32.mrf.mxu0
    %2001 = vdwg.mxu0
    %2002 = vst [vmem:[#allocation5] sm:$0x3] %v1997
    // Predicated region
    $region42: #{_forward_parts.1} parent=1 // pred_check
      _
    $region43: #{_forward_parts.1} parent=1 // pred_check_branch
      %2004 = sbr.rel (0) target = $region45
    $region44: #{_forward_parts.1} parent=1 // pred_region
      %s2006 = ssub.s32 128, 128
      %2007 = vsyncadd [#allocation4], %s2006
      %s2009 = sshll.u32 [#allocation3], 4
      %s2010 = int_to_ptr.vmem [resolvable:$true] %s2009
      %2012 = dma.vmem_to_hbm [thread:$0]  %s2010, 128, %s10, [#allocation4]
    $region45: #{_forward_parts.1} parent=1 // pred_fallthru
      _
    // Predicated region
    $region46: #{_forward_parts.1} parent=1 // pred_check
      _
    $region47: #{_forward_parts.1} parent=1 // pred_check_branch
      %2014 = sbr.rel (0) target = $region49
    $region48: #{_forward_parts.1} parent=1 // pred_region
      %s2016 = ssub.s32 32, 32
      %2017 = vsyncadd [#allocation6], %s2016
      %s2019 = sshll.u32 [#allocation5], 4
      %s2020 = int_to_ptr.vmem [resolvable:$true] %s2019
      %2022 = dma.vmem_to_hbm [thread:$0]  %s2020, 32, %s11, [#allocation6]
    $region49: #{_forward_parts.1} parent=1 // pred_fallthru
      _
    // Predicated region
    $region50: #{_forward_parts.1} parent=1 // pred_check
      _
    $region51: #{_forward_parts.1} parent=1 // pred_check_branch
      %2024 = sbr.rel (0) target = $region53
    $region52: #{_forward_parts.1} parent=1 // pred_region
      %2025 = dma.done [#allocation4], 128
    $region53: #{_forward_parts.1} parent=1 // pred_fallthru
      _
    // Predicated region
    $region54: #{_forward_parts.1} parent=1 // pred_check
      _
    $region55: #{_forward_parts.1} parent=1 // pred_check_branch
      %2027 = sbr.rel (0) target = $region57
    $region56: #{_forward_parts.1} parent=1 // pred_region
      %2028 = dma.done [#allocation6], 32
    $region57: #{_forward_parts.1} parent=1 // pred_fallthru
      _
    %2029 = vsyncpa [#allocation4], 1
    %2030 = vsyncpa [#allocation6], 1

</llo_original>
